<compile_context>
chip_gen: v6e
topology: v6e:2x2x1
jax: 0.10.0
libtpu: 0.0.40
codegen_flags: <defaults>
</compile_context>

<pallas_src>
import math
import functools

import jax
import jax.numpy as jnp
from jax.experimental import pallas as pl
from jax.experimental.pallas import tpu as pltpu


# ----------------------------------------------------------------------------
# Shared math helpers (pure jnp -> usable inside and outside the kernel)
# ----------------------------------------------------------------------------
def _layernorm(x, g, b, eps=1e-5):
    mu = jnp.mean(x, axis=-1, keepdims=True)
    var = jnp.mean((x - mu) ** 2, axis=-1, keepdims=True)
    return (x - mu) * jax.lax.rsqrt(var + eps) * g + b


# ----------------------------------------------------------------------------
# Fused transformer kernel: one grid step = (batch element, encoder layer)
# ----------------------------------------------------------------------------
def transformer_kernel(
    emb_ref, pe_ref,
    wqkv_ref, bqkv_ref, wo_ref, bo_ref,
    g1_ref, be1_ref,
    w1_ref, b1_ref, w2_ref, b2_ref,
    g2_ref, be2_ref,
    o_ref,
    x_scratch,
    *, num_heads, d_model,
):
    l = pl.program_id(1)
    num_layers = pl.num_programs(1)

    D = d_model
    H = num_heads
    depth = D // H
    S = x_scratch.shape[0]
    inv_sqrt_depth = 1.0 / math.sqrt(depth)

    # --- layer 0: x = embedding * sqrt(d_model) + positional encoding -------
    @pl.when(l == 0)
    def _():
        x_scratch[...] = emb_ref[0] * math.sqrt(D) + pe_ref[...]

    x = x_scratch[...]                          # (S, D) f32, resident in VMEM
    xb = x.astype(jnp.bfloat16)

    # --- Multi-head self attention ------------------------------------------
    # Fused QKV projection: single pass of x through the MXU.
    qkv = jnp.dot(xb, wqkv_ref[0], preferred_element_type=jnp.float32) + bqkv_ref[0]
    q = qkv[:, 0 * D:1 * D]
    k = qkv[:, 1 * D:2 * D]
    v = qkv[:, 2 * D:3 * D]

    # Head-batched attention: (S, D) -> (H, S, depth), one batched einsum per stage.
    qh = q.reshape(S, H, depth).transpose(1, 0, 2).astype(jnp.bfloat16)
    kh = k.reshape(S, H, depth).transpose(1, 0, 2).astype(jnp.bfloat16)
    vh = v.reshape(S, H, depth).transpose(1, 0, 2).astype(jnp.bfloat16)

    scores = jnp.einsum('hqd,hkd->hqk', qh, kh,
                        preferred_element_type=jnp.float32) * inv_sqrt_depth
    # TODO(synk): mask support (forward is exercised with mask=None here).
    scores = scores - jnp.max(scores, axis=-1, keepdims=True)
    e = jnp.exp(scores)
    attn = e * pl.reciprocal(jnp.sum(e, axis=-1, keepdims=True), approx=True)

    ctx = jnp.einsum('hqk,hkd->hqd', attn.astype(jnp.bfloat16), vh,
                     preferred_element_type=jnp.float32)        # (H, S, depth)
    ctx = ctx.transpose(1, 0, 2).reshape(S, D)                  # (S, D)

    attn_out = jnp.dot(ctx.astype(jnp.bfloat16), wo_ref[0],
                       preferred_element_type=jnp.float32) + bo_ref[0]

    # residual + LayerNorm 1 (dropout = identity in eval mode)
    out1 = _layernorm(x + attn_out, g1_ref[0], be1_ref[0])

    # --- FeedForward ----------------------------------------------------------
    h1 = jnp.maximum(
        jnp.dot(out1.astype(jnp.bfloat16), w1_ref[0],
                preferred_element_type=jnp.float32) + b1_ref[0],
        0.0,
    )
    ffn = jnp.dot(h1.astype(jnp.bfloat16), w2_ref[0],
                  preferred_element_type=jnp.float32) + b2_ref[0]

    # residual + LayerNorm 2 (dropout = identity)
    out2 = _layernorm(out1 + ffn, g2_ref[0], be2_ref[0])

    # Keep activations resident for the next layer; emit only at the last layer.
    x_scratch[...] = out2

    @pl.when(l == num_layers - 1)
    def _():
        o_ref[0] = out2


# ----------------------------------------------------------------------------
# Wrapper
# ----------------------------------------------------------------------------
def transformer_forward(tokens, emb_table, params, pe_table, d_model, num_heads):
    B, S = tokens.shape
    D = d_model
    L = params["wqkv"].shape[0]
    dff = params["w1"].shape[-1]

    # Embedding gather stays in plain JAX (glue); the hot path is one fused kernel.
    emb = jnp.take(emb_table, tokens, axis=0)          # (B, S, D) f32
    pe = pe_table[:S]                                   # (S, D) f32

    # Per-layer weight blocks: index_map follows the layer grid axis, so each
    # layer's weights stream through the pipeline (double-buffered along `l`).
    w_spec = lambda shape: pl.BlockSpec(shape, lambda b, l: (l, 0, 0))

    grid_spec = pltpu.PrefetchScalarGridSpec(
        num_scalar_prefetch=0,
        grid=(B, L),
        in_specs=[
            pl.BlockSpec((1, S, D), lambda b, l: (b, 0, 0)),   # embeddings
            pl.BlockSpec((S, D), lambda b, l: (0, 0)),         # positional enc
            w_spec((1, D, 3 * D)), w_spec((1, 1, 3 * D)),      # wqkv (bf16), bqkv
            w_spec((1, D, D)), w_spec((1, 1, D)),              # wo (bf16), bo
            w_spec((1, 1, D)), w_spec((1, 1, D)),              # ln1 gamma, beta
            w_spec((1, D, dff)), w_spec((1, 1, dff)),          # ffn w1 (bf16), b1
            w_spec((1, dff, D)), w_spec((1, 1, D)),            # ffn w2 (bf16), b2
            w_spec((1, 1, D)), w_spec((1, 1, D)),              # ln2 gamma, beta
        ],
        out_specs=pl.BlockSpec((1, S, D), lambda b, l: (b, 0, 0)),
        scratch_shapes=[pltpu.VMEM((S, D), jnp.float32)],      # resident activations
    )

    return pl.pallas_call(
        functools.partial(transformer_kernel, num_heads=num_heads, d_model=d_model),
        out_shape=jax.ShapeDtypeStruct((B, S, D), jnp.float32),
        grid_spec=grid_spec,
        compiler_params=pltpu.CompilerParams(
            dimension_semantics=("parallel", "arbitrary")),
    )(
        emb, pe,
        params["wqkv"], params["bqkv"], params["wo"], params["bo"],
        params["ln1_g"], params["ln1_b"],
        params["w1"], params["b1"], params["w2"], params["b2"],
        params["ln2_g"], params["ln2_b"],
    )


# ----------------------------------------------------------------------------
# Parameters / positional encoding
# ----------------------------------------------------------------------------
def make_positional_encoding(max_len, d_model):
    position = jnp.arange(max_len, dtype=jnp.float32)[:, None]
    div_term = jnp.exp(
        jnp.arange(0, d_model, 2, dtype=jnp.float32) * (-math.log(10000.0) / d_model)
    )
    pe = jnp.zeros((max_len, d_model), dtype=jnp.float32)
    pe = pe.at[:, 0::2].set(jnp.sin(position * div_term))
    pe = pe.at[:, 1::2].set(jnp.cos(position * div_term))
    return pe


def init_params(key, num_layers, d_model, dff, vocab_size):
    D = d_model
    keys = jax.random.split(key, 1 + num_layers)
    emb_table = jax.random.normal(keys[0], (vocab_size, D), jnp.float32) * 0.02

    def lin(k, fan_in, fan_out):
        k1, k2 = jax.random.split(k)
        bound = 1.0 / math.sqrt(fan_in)
        w = jax.random.uniform(k1, (fan_in, fan_out), jnp.float32, -bound, bound)
        b = jax.random.uniform(k2, (1, fan_out), jnp.float32, -bound, bound)
        return w, b

    names = ("wqkv", "bqkv", "wo", "bo", "ln1_g", "ln1_b",
             "w1", "b1", "w2", "b2", "ln2_g", "ln2_b")
    acc = {n: [] for n in names}
    for i in range(num_layers):
        lk = jax.random.split(keys[1 + i], 6)
        wq, bq = lin(lk[0], D, D)
        wk, bk = lin(lk[1], D, D)
        wv, bv = lin(lk[2], D, D)
        wo, bo = lin(lk[3], D, D)
        w1, b1 = lin(lk[4], D, dff)
        w2, b2 = lin(lk[5], dff, D)
        acc["wqkv"].append(jnp.concatenate([wq, wk, wv], axis=1))   # (D, 3D)
        acc["bqkv"].append(jnp.concatenate([bq, bk, bv], axis=1))   # (1, 3D)
        acc["wo"].append(wo)
        acc["bo"].append(bo)
        acc["ln1_g"].append(jnp.ones((1, D), jnp.float32))
        acc["ln1_b"].append(jnp.zeros((1, D), jnp.float32))
        acc["w1"].append(w1)
        acc["b1"].append(b1)
        acc["w2"].append(w2)
        acc["b2"].append(b2)
        acc["ln2_g"].append(jnp.ones((1, D), jnp.float32))
        acc["ln2_b"].append(jnp.zeros((1, D), jnp.float32))

    params = {k: jnp.stack(v) for k, v in acc.items()}      # leading layer axis
    # Matmul weights in bf16 (half the weight DMA / VMEM; f32 accumulation).
    for k in ("wqkv", "wo", "w1", "w2"):
        params[k] = params[k].astype(jnp.bfloat16)
    return emb_table, params


# ----------------------------------------------------------------------------
# Pure-JAX reference (mirrors the kernel's mixed precision for validation)
# ----------------------------------------------------------------------------
def reference_forward(tokens, emb_table, params, pe_table, d_model, num_heads):
    B, S = tokens.shape
    D, H = d_model, num_heads
    depth = D // H
    bf16 = jnp.bfloat16
    x = jnp.take(emb_table, tokens, axis=0) * math.sqrt(D) + pe_table[:S][None]
    L = params["wqkv"].shape[0]
    for l in range(L):
        qkv = jnp.einsum('bsd,df->bsf', x.astype(bf16), params["wqkv"][l],
                         preferred_element_type=jnp.float32) + params["bqkv"][l]
        q, k, v = qkv[..., :D], qkv[..., D:2 * D], qkv[..., 2 * D:]
        qh = q.reshape(B, S, H, depth).transpose(0, 2, 1, 3)
        kh = k.reshape(B, S, H, depth).transpose(0, 2, 1, 3)
        vh = v.reshape(B, S, H, depth).transpose(0, 2, 1, 3)
        scores = jnp.einsum('bhqd,bhkd->bhqk', qh.astype(bf16), kh.astype(bf16),
                            preferred_element_type=jnp.float32) / math.sqrt(depth)
        attn = jax.nn.softmax(scores, axis=-1)
        ctx = jnp.einsum('bhqk,bhkd->bhqd', attn.astype(bf16), vh.astype(bf16),
                         preferred_element_type=jnp.float32)
        ctx = ctx.transpose(0, 2, 1, 3).reshape(B, S, D)
        attn_out = jnp.einsum('bsd,df->bsf', ctx.astype(bf16), params["wo"][l],
                              preferred_element_type=jnp.float32) + params["bo"][l]
        out1 = _layernorm(x + attn_out, params["ln1_g"][l], params["ln1_b"][l])
        h1 = jax.nn.relu(
            jnp.einsum('bsd,df->bsf', out1.astype(bf16), params["w1"][l],
                       preferred_element_type=jnp.float32) + params["b1"][l])
        ffn = jnp.einsum('bsf,fd->bsd', h1.astype(bf16), params["w2"][l],
                         preferred_element_type=jnp.float32) + params["b2"][l]
        x = _layernorm(out1 + ffn, params["ln2_g"][l], params["ln2_b"][l])
    return x


# ----------------------------------------------------------------------------
if __name__ == "__main__":
    num_layers = 2
    d_model = 32          # NOTE: production configs should pad D/dff to x128 for lane-dense vregs
    num_heads = 4
    dff = 64
    vocab_size = 50
    max_pos = 128
    B, S = 2, 8

    key = jax.random.PRNGKey(0)
    k_tok, k_par = jax.random.split(key)

    tokens = jax.random.randint(k_tok, (B, S), 0, vocab_size, dtype=jnp.int32)
    emb_table, params = init_params(k_par, num_layers, d_model, dff, vocab_size)
    pe_table = make_positional_encoding(max_pos, d_model)

    out = transformer_forward(tokens, emb_table, params, pe_table, d_model, num_heads)
    out = jax.block_until_ready(out)
    assert out.shape == (B, S, d_model)
    assert bool(jnp.all(jnp.isfinite(out)))

    ref = reference_forward(tokens, emb_table, params, pe_table, d_model, num_heads)
    ref = jax.block_until_ready(ref)
    max_diff = float(jnp.max(jnp.abs(out - ref)))
    assert max_diff < 5e-2, f"kernel/reference mismatch: max_diff={max_diff}"

    print("KERNEL_OK")
</pallas_src>

<mosaic_0001>
module attributes {stable_mosaic.version = 11 : i64} {
  func.func @transformer_kernel(%arg0: i32, %arg1: i32, %arg2: memref<1x8x32xf32, #tpu.memory_space<vmem>>, %arg3: memref<8x32xf32, #tpu.memory_space<vmem>>, %arg4: memref<1x32x96xbf16, #tpu.memory_space<vmem>>, %arg5: memref<1x1x96xf32, #tpu.memory_space<vmem>>, %arg6: memref<1x32x32xbf16, #tpu.memory_space<vmem>>, %arg7: memref<1x1x32xf32, #tpu.memory_space<vmem>>, %arg8: memref<1x1x32xf32, #tpu.memory_space<vmem>>, %arg9: memref<1x1x32xf32, #tpu.memory_space<vmem>>, %arg10: memref<1x32x64xbf16, #tpu.memory_space<vmem>>, %arg11: memref<1x1x64xf32, #tpu.memory_space<vmem>>, %arg12: memref<1x64x32xbf16, #tpu.memory_space<vmem>>, %arg13: memref<1x1x32xf32, #tpu.memory_space<vmem>>, %arg14: memref<1x1x32xf32, #tpu.memory_space<vmem>>, %arg15: memref<1x1x32xf32, #tpu.memory_space<vmem>>, %arg16: memref<1x8x32xf32, #tpu.memory_space<vmem>>, %arg17: memref<8x32xf32, #tpu.memory_space<vmem>>) attributes {dimension_semantics = [#tpu.dimension_semantics<parallel>, #tpu.dimension_semantics<arbitrary>], iteration_bounds = array<i64: 2, 2>, scalar_prefetch = 0 : i64, scratch_operands = 1 : i64, tpu.core_type = #tpu.core_type<tc>, window_params = [{transform_indices = @transform_0, window_bounds = array<i64: 1, 8, 32>}, {pipeline_mode = #tpu.pipeline_mode<synchronous>, transform_indices = @transform_1, window_bounds = array<i64: 8, 32>}, {transform_indices = @transform_2, window_bounds = array<i64: 1, 32, 96>}, {transform_indices = @transform_3, window_bounds = array<i64: 1, 1, 96>}, {transform_indices = @transform_4, window_bounds = array<i64: 1, 32, 32>}, {transform_indices = @transform_5, window_bounds = array<i64: 1, 1, 32>}, {transform_indices = @transform_6, window_bounds = array<i64: 1, 1, 32>}, {transform_indices = @transform_7, window_bounds = array<i64: 1, 1, 32>}, {transform_indices = @transform_8, window_bounds = array<i64: 1, 32, 64>}, {transform_indices = @transform_9, window_bounds = array<i64: 1, 1, 64>}, {transform_indices = @transform_10, window_bounds = array<i64: 1, 64, 32>}, {transform_indices = @transform_11, window_bounds = array<i64: 1, 1, 32>}, {transform_indices = @transform_12, window_bounds = array<i64: 1, 1, 32>}, {transform_indices = @transform_13, window_bounds = array<i64: 1, 1, 32>}, {transform_indices = @transform_14, window_bounds = array<i64: 1, 8, 32>}]} {
    %c0_i32 = arith.constant 0 : i32
    %0 = arith.cmpi eq, %arg1, %c0_i32 : i32
    %1 = arith.extui %0 : i1 to i32
    %c0_i32_0 = arith.constant 0 : i32
    %2 = arith.cmpi ne, %1, %c0_i32_0 : i32
    scf.if %2 {
      %c0_60 = arith.constant 0 : index
      %c0_61 = arith.constant 0 : index
      %c0_62 = arith.constant 0 : index
      %125 = vector.load %arg2[%c0_60, %c0_61, %c0_62] : memref<1x8x32xf32, #tpu.memory_space<vmem>>, vector<1x8x32xf32>
      %126 = vector.shape_cast %125 : vector<1x8x32xf32> to vector<8x32xf32>
      %cst_63 = arith.constant 5.65685415 : f32
      %127 = vector.broadcast %cst_63 : f32 to vector<8x32xf32>
      %128 = arith.mulf %126, %127 : vector<8x32xf32>
      %c0_64 = arith.constant 0 : index
      %c0_65 = arith.constant 0 : index
      %129 = vector.load %arg3[%c0_64, %c0_65] : memref<8x32xf32, #tpu.memory_space<vmem>>, vector<8x32xf32>
      %130 = arith.addf %128, %129 : vector<8x32xf32>
      %c0_66 = arith.constant 0 : index
      %c0_67 = arith.constant 0 : index
      %131 = vector.load %arg17[%c0_66, %c0_67] : memref<8x32xf32, #tpu.memory_space<vmem>>, vector<8x32xf32>
      tpu.vector_store %arg17[%c0_66, %c0_67], %130 {strides = array<i32>} : memref<8x32xf32, #tpu.memory_space<vmem>>, vector<8x32xf32>,
    } else {
    }
    %c0 = arith.constant 0 : index
    %c0_1 = arith.constant 0 : index
    %3 = vector.load %arg17[%c0, %c0_1] : memref<8x32xf32, #tpu.memory_space<vmem>>, vector<8x32xf32>
    %4 = arith.truncf %3 : vector<8x32xf32> to vector<8x32xbf16>
    %c0_2 = arith.constant 0 : index
    %c0_3 = arith.constant 0 : index
    %c0_4 = arith.constant 0 : index
    %5 = vector.load %arg4[%c0_2, %c0_3, %c0_4] : memref<1x32x96xbf16, #tpu.memory_space<vmem>>, vector<1x32x96xbf16>
    %6 = vector.shape_cast %5 : vector<1x32x96xbf16> to vector<32x96xbf16>
    %cst = arith.constant dense<0.000000e+00> : vector<8x96xf32>
    %7 = tpu.matmul %4, %6, %cst {dimension_numbers = #tpu.dot_dimension_numbers<[1], [0], [0], [1], [0, 0, 1, 1], [], []>} : vector<8x32xbf16>, vector<32x96xbf16>, vector<8x96xf32> -> vector<8x96xf32>
    %c0_5 = arith.constant 0 : index
    %c0_6 = arith.constant 0 : index
    %c0_7 = arith.constant 0 : index
    %8 = vector.load %arg5[%c0_5, %c0_6, %c0_7] : memref<1x1x96xf32, #tpu.memory_space<vmem>>, vector<1x1x96xf32>
    %9 = vector.shape_cast %8 : vector<1x1x96xf32> to vector<1x96xf32>
    %10 = vector.broadcast %9 : vector<1x96xf32> to vector<8x96xf32>
    %11 = arith.addf %7, %10 : vector<8x96xf32>
    %12 = vector.extract_strided_slice %11 {offsets = [0, 0], sizes = [8, 32], strides = [1, 1]} : vector<8x96xf32> to vector<8x32xf32>
    %13 = vector.extract_strided_slice %11 {offsets = [0, 32], sizes = [8, 32], strides = [1, 1]} : vector<8x96xf32> to vector<8x32xf32>
    %14 = vector.extract_strided_slice %11 {offsets = [0, 64], sizes = [8, 32], strides = [1, 1]} : vector<8x96xf32> to vector<8x32xf32>
    %15 = vector.shape_cast %12 : vector<8x32xf32> to vector<8x4x8xf32>
    %16 = tpu.transpose %15, [1, 0, 2] : vector<8x4x8xf32> -> vector<4x8x8xf32>
    %17 = arith.truncf %16 : vector<4x8x8xf32> to vector<4x8x8xbf16>
    %18 = vector.shape_cast %13 : vector<8x32xf32> to vector<8x4x8xf32>
    %19 = tpu.transpose %18, [1, 0, 2] : vector<8x4x8xf32> -> vector<4x8x8xf32>
    %20 = arith.truncf %19 : vector<4x8x8xf32> to vector<4x8x8xbf16>
    %21 = vector.shape_cast %14 : vector<8x32xf32> to vector<8x4x8xf32>
    %22 = tpu.transpose %21, [1, 0, 2] : vector<8x4x8xf32> -> vector<4x8x8xf32>
    %23 = arith.truncf %22 : vector<4x8x8xf32> to vector<4x8x8xbf16>
    "tpu.trace_start"() <{level = 10 : i32, message = "hqd,hkd->hqk"}> : () -> ()
    %cst_8 = arith.constant dense<0.000000e+00> : vector<4x8x8xf32>
    %24 = tpu.matmul %17, %20, %cst_8 {dimension_numbers = #tpu.dot_dimension_numbers<[2], [2], [1], [1], [0, 0, 0, 1, 1, 1], [0], [0]>} : vector<4x8x8xbf16>, vector<4x8x8xbf16>, vector<4x8x8xf32> -> vector<4x8x8xf32>
    "tpu.trace_stop"() : () -> ()
    %cst_9 = arith.constant 0.353553385 : f32
    %25 = vector.broadcast %cst_9 : f32 to vector<4x8x8xf32>
    %26 = arith.mulf %24, %25 : vector<4x8x8xf32>
    %cst_10 = arith.constant dense<0xFF800000> : vector<4x8xf32>
    %27 = vector.multi_reduction <maximumf>, %26, %cst_10 [2] : vector<4x8x8xf32> to vector<4x8xf32>
    %28 = vector.shape_cast %27 : vector<4x8xf32> to vector<4x8x1xf32>
    %29 = vector.broadcast %28 : vector<4x8x1xf32> to vector<4x8x8xf32>
    %30 = arith.subf %26, %29 : vector<4x8x8xf32>
    %31 = math.exp %30 : vector<4x8x8xf32>
    %cst_11 = arith.constant dense<0.000000e+00> : vector<4x8xf32>
    %32 = vector.multi_reduction <add>, %31, %cst_11 [2] : vector<4x8x8xf32> to vector<4x8xf32>
    %33 = vector.shape_cast %32 : vector<4x8xf32> to vector<4x8x1xf32>
    %34 = tpu.reciprocal %33 {approx = true} : vector<4x8x1xf32> -> vector<4x8x1xf32>
    %35 = vector.broadcast %34 : vector<4x8x1xf32> to vector<4x8x8xf32>
    %36 = arith.mulf %31, %35 : vector<4x8x8xf32>
    %37 = arith.truncf %36 : vector<4x8x8xf32> to vector<4x8x8xbf16>
    "tpu.trace_start"() <{level = 10 : i32, message = "hqk,hkd->hqd"}> : () -> ()
    %cst_12 = arith.constant dense<0.000000e+00> : vector<4x8x8xf32>
    %38 = tpu.matmul %37, %23, %cst_12 {dimension_numbers = #tpu.dot_dimension_numbers<[2], [1], [1], [2], [0, 0, 0, 1, 1, 2], [0], [0]>} : vector<4x8x8xbf16>, vector<4x8x8xbf16>, vector<4x8x8xf32> -> vector<4x8x8xf32>
    "tpu.trace_stop"() : () -> ()
    %39 = tpu.transpose %38, [1, 0, 2] : vector<4x8x8xf32> -> vector<8x4x8xf32>
    %40 = vector.shape_cast %39 : vector<8x4x8xf32> to vector<8x32xf32>
    %41 = arith.truncf %40 : vector<8x32xf32> to vector<8x32xbf16>
    %c0_13 = arith.constant 0 : index
    %c0_14 = arith.constant 0 : index
    %c0_15 = arith.constant 0 : index
    %42 = vector.load %arg6[%c0_13, %c0_14, %c0_15] : memref<1x32x32xbf16, #tpu.memory_space<vmem>>, vector<1x32x32xbf16>
    %43 = vector.shape_cast %42 : vector<1x32x32xbf16> to vector<32x32xbf16>
    %cst_16 = arith.constant dense<0.000000e+00> : vector<8x32xf32>
    %44 = tpu.matmul %41, %43, %cst_16 {dimension_numbers = #tpu.dot_dimension_numbers<[1], [0], [0], [1], [0, 0, 1, 1], [], []>} : vector<8x32xbf16>, vector<32x32xbf16>, vector<8x32xf32> -> vector<8x32xf32>
    %c0_17 = arith.constant 0 : index
    %c0_18 = arith.constant 0 : index
    %c0_19 = arith.constant 0 : index
    %45 = vector.load %arg7[%c0_17, %c0_18, %c0_19] : memref<1x1x32xf32, #tpu.memory_space<vmem>>, vector<1x1x32xf32>
    %46 = vector.shape_cast %45 : vector<1x1x32xf32> to vector<1x32xf32>
    %47 = vector.broadcast %46 : vector<1x32xf32> to vector<8x32xf32>
    %48 = arith.addf %44, %47 : vector<8x32xf32>
    %49 = arith.addf %3, %48 : vector<8x32xf32>
    %c0_20 = arith.constant 0 : index
    %c0_21 = arith.constant 0 : index
    %c0_22 = arith.constant 0 : index
    %50 = vector.load %arg8[%c0_20, %c0_21, %c0_22] : memref<1x1x32xf32, #tpu.memory_space<vmem>>, vector<1x1x32xf32>
    %51 = vector.shape_cast %50 : vector<1x1x32xf32> to vector<1x32xf32>
    %c0_23 = arith.constant 0 : index
    %c0_24 = arith.constant 0 : index
    %c0_25 = arith.constant 0 : index
    %52 = vector.load %arg9[%c0_23, %c0_24, %c0_25] : memref<1x1x32xf32, #tpu.memory_space<vmem>>, vector<1x1x32xf32>
    %53 = vector.shape_cast %52 : vector<1x1x32xf32> to vector<1x32xf32>
    %cst_26 = arith.constant dense<0.000000e+00> : vector<8xf32>
    %54 = vector.multi_reduction <add>, %49, %cst_26 [1] : vector<8x32xf32> to vector<8xf32>
    %55 = vector.shape_cast %54 : vector<8xf32> to vector<8x1xf32>
    %cst_27 = arith.constant 3.200000e+01 : f32
    %56 = vector.broadcast %cst_27 : f32 to vector<8x1xf32>
    %57 = arith.divf %55, %56 : vector<8x1xf32>
    %58 = vector.broadcast %57 : vector<8x1xf32> to vector<8x32xf32>
    %59 = arith.subf %49, %58 : vector<8x32xf32>
    %60 = arith.mulf %59, %59 : vector<8x32xf32>
    %cst_28 = arith.constant dense<0.000000e+00> : vector<8xf32>
    %61 = vector.multi_reduction <add>, %60, %cst_28 [1] : vector<8x32xf32> to vector<8xf32>
    %62 = vector.shape_cast %61 : vector<8xf32> to vector<8x1xf32>
    %cst_29 = arith.constant 3.200000e+01 : f32
    %63 = vector.broadcast %cst_29 : f32 to vector<8x1xf32>
    %64 = arith.divf %62, %63 : vector<8x1xf32>
    %65 = vector.broadcast %57 : vector<8x1xf32> to vector<8x32xf32>
    %66 = arith.subf %49, %65 : vector<8x32xf32>
    %cst_30 = arith.constant 9.99999974E-6 : f32
    %67 = vector.broadcast %cst_30 : f32 to vector<8x1xf32>
    %68 = arith.addf %64, %67 : vector<8x1xf32>
    %69 = math.rsqrt %68 : vector<8x1xf32>
    %70 = vector.broadcast %69 : vector<8x1xf32> to vector<8x32xf32>
    %71 = arith.mulf %66, %70 : vector<8x32xf32>
    %72 = vector.broadcast %51 : vector<1x32xf32> to vector<8x32xf32>
    %73 = arith.mulf %71, %72 : vector<8x32xf32>
    %74 = vector.broadcast %53 : vector<1x32xf32> to vector<8x32xf32>
    %75 = arith.addf %73, %74 : vector<8x32xf32>
    %76 = arith.truncf %75 : vector<8x32xf32> to vector<8x32xbf16>
    %c0_31 = arith.constant 0 : index
    %c0_32 = arith.constant 0 : index
    %c0_33 = arith.constant 0 : index
    %77 = vector.load %arg10[%c0_31, %c0_32, %c0_33] : memref<1x32x64xbf16, #tpu.memory_space<vmem>>, vector<1x32x64xbf16>
    %78 = vector.shape_cast %77 : vector<1x32x64xbf16> to vector<32x64xbf16>
    %cst_34 = arith.constant dense<0.000000e+00> : vector<8x64xf32>
    %79 = tpu.matmul %76, %78, %cst_34 {dimension_numbers = #tpu.dot_dimension_numbers<[1], [0], [0], [1], [0, 0, 1, 1], [], []>} : vector<8x32xbf16>, vector<32x64xbf16>, vector<8x64xf32> -> vector<8x64xf32>
    %c0_35 = arith.constant 0 : index
    %c0_36 = arith.constant 0 : index
    %c0_37 = arith.constant 0 : index
    %80 = vector.load %arg11[%c0_35, %c0_36, %c0_37] : memref<1x1x64xf32, #tpu.memory_space<vmem>>, vector<1x1x64xf32>
    %81 = vector.shape_cast %80 : vector<1x1x64xf32> to vector<1x64xf32>
    %82 = vector.broadcast %81 : vector<1x64xf32> to vector<8x64xf32>
    %83 = arith.addf %79, %82 : vector<8x64xf32>
    %cst_38 = arith.constant 0.000000e+00 : f32
    %84 = vector.broadcast %cst_38 : f32 to vector<8x64xf32>
    %85 = arith.maximumf %83, %84 : vector<8x64xf32>
    %86 = arith.truncf %85 : vector<8x64xf32> to vector<8x64xbf16>
    %c0_39 = arith.constant 0 : index
    %c0_40 = arith.constant 0 : index
    %c0_41 = arith.constant 0 : index
    %87 = vector.load %arg12[%c0_39, %c0_40, %c0_41] : memref<1x64x32xbf16, #tpu.memory_space<vmem>>, vector<1x64x32xbf16>
    %88 = vector.shape_cast %87 : vector<1x64x32xbf16> to vector<64x32xbf16>
    %cst_42 = arith.constant dense<0.000000e+00> : vector<8x32xf32>
    %89 = tpu.matmul %86, %88, %cst_42 {dimension_numbers = #tpu.dot_dimension_numbers<[1], [0], [0], [1], [0, 0, 1, 1], [], []>} : vector<8x64xbf16>, vector<64x32xbf16>, vector<8x32xf32> -> vector<8x32xf32>
    %c0_43 = arith.constant 0 : index
    %c0_44 = arith.constant 0 : index
    %c0_45 = arith.constant 0 : index
    %90 = vector.load %arg13[%c0_43, %c0_44, %c0_45] : memref<1x1x32xf32, #tpu.memory_space<vmem>>, vector<1x1x32xf32>
    %91 = vector.shape_cast %90 : vector<1x1x32xf32> to vector<1x32xf32>
    %92 = vector.broadcast %91 : vector<1x32xf32> to vector<8x32xf32>
    %93 = arith.addf %89, %92 : vector<8x32xf32>
    %94 = arith.addf %75, %93 : vector<8x32xf32>
    %c0_46 = arith.constant 0 : index
    %c0_47 = arith.constant 0 : index
    %c0_48 = arith.constant 0 : index
    %95 = vector.load %arg14[%c0_46, %c0_47, %c0_48] : memref<1x1x32xf32, #tpu.memory_space<vmem>>, vector<1x1x32xf32>
    %96 = vector.shape_cast %95 : vector<1x1x32xf32> to vector<1x32xf32>
    %c0_49 = arith.constant 0 : index
    %c0_50 = arith.constant 0 : index
    %c0_51 = arith.constant 0 : index
    %97 = vector.load %arg15[%c0_49, %c0_50, %c0_51] : memref<1x1x32xf32, #tpu.memory_space<vmem>>, vector<1x1x32xf32>
    %98 = vector.shape_cast %97 : vector<1x1x32xf32> to vector<1x32xf32>
    %cst_52 = arith.constant dense<0.000000e+00> : vector<8xf32>
    %99 = vector.multi_reduction <add>, %94, %cst_52 [1] : vector<8x32xf32> to vector<8xf32>
    %100 = vector.shape_cast %99 : vector<8xf32> to vector<8x1xf32>
    %cst_53 = arith.constant 3.200000e+01 : f32
    %101 = vector.broadcast %cst_53 : f32 to vector<8x1xf32>
    %102 = arith.divf %100, %101 : vector<8x1xf32>
    %103 = vector.broadcast %102 : vector<8x1xf32> to vector<8x32xf32>
    %104 = arith.subf %94, %103 : vector<8x32xf32>
    %105 = arith.mulf %104, %104 : vector<8x32xf32>
    %cst_54 = arith.constant dense<0.000000e+00> : vector<8xf32>
    %106 = vector.multi_reduction <add>, %105, %cst_54 [1] : vector<8x32xf32> to vector<8xf32>
    %107 = vector.shape_cast %106 : vector<8xf32> to vector<8x1xf32>
    %cst_55 = arith.constant 3.200000e+01 : f32
    %108 = vector.broadcast %cst_55 : f32 to vector<8x1xf32>
    %109 = arith.divf %107, %108 : vector<8x1xf32>
    %110 = vector.broadcast %102 : vector<8x1xf32> to vector<8x32xf32>
    %111 = arith.subf %94, %110 : vector<8x32xf32>
    %cst_56 = arith.constant 9.99999974E-6 : f32
    %112 = vector.broadcast %cst_56 : f32 to vector<8x1xf32>
    %113 = arith.addf %109, %112 : vector<8x1xf32>
    %114 = math.rsqrt %113 : vector<8x1xf32>
    %115 = vector.broadcast %114 : vector<8x1xf32> to vector<8x32xf32>
    %116 = arith.mulf %111, %115 : vector<8x32xf32>
    %117 = vector.broadcast %96 : vector<1x32xf32> to vector<8x32xf32>
    %118 = arith.mulf %116, %117 : vector<8x32xf32>
    %119 = vector.broadcast %98 : vector<1x32xf32> to vector<8x32xf32>
    %120 = arith.addf %118, %119 : vector<8x32xf32>
    %c0_57 = arith.constant 0 : index
    %c0_58 = arith.constant 0 : index
    %121 = vector.load %arg17[%c0_57, %c0_58] : memref<8x32xf32, #tpu.memory_space<vmem>>, vector<8x32xf32>
    tpu.vector_store %arg17[%c0_57, %c0_58], %120 {strides = array<i32>} : memref<8x32xf32, #tpu.memory_space<vmem>>, vector<8x32xf32>,
    %c1_i32 = arith.constant 1 : i32
    %122 = arith.cmpi eq, %arg1, %c1_i32 : i32
    %123 = arith.extui %122 : i1 to i32
    %c0_i32_59 = arith.constant 0 : i32
    %124 = arith.cmpi ne, %123, %c0_i32_59 : i32
    scf.if %124 {
      %c0_60 = arith.constant 0 : index
      %c0_61 = arith.constant 0 : index
      %c0_62 = arith.constant 0 : index
      %125 = vector.load %arg16[%c0_60, %c0_61, %c0_62] : memref<1x8x32xf32, #tpu.memory_space<vmem>>, vector<1x8x32xf32>
      %126 = vector.shape_cast %125 : vector<1x8x32xf32> to vector<8x32xf32>
      %127 = vector.shape_cast %120 : vector<8x32xf32> to vector<1x8x32xf32>
      tpu.vector_store %arg16[%c0_60, %c0_61, %c0_62], %127 {strides = array<i32>} : memref<1x8x32xf32, #tpu.memory_space<vmem>>, vector<1x8x32xf32>,
    } else {
    }
    return
  }
  func.func @transform_0(%arg0: i32, %arg1: i32) -> (i32, i32, i32) {
    %c0_i32 = arith.constant 0 : i32
    %c0_i32_0 = arith.constant 0 : i32
    %c0_i32_1 = arith.constant 0 : i32
    return %arg0, %c0_i32, %c0_i32_0 : i32, i32, i32
  }
  func.func @transform_1(%arg0: i32, %arg1: i32) -> (i32, i32) {
    %c0_i32 = arith.constant 0 : i32
    %c0_i32_0 = arith.constant 0 : i32
    %c0_i32_1 = arith.constant 0 : i32
    return %c0_i32, %c0_i32_0 : i32, i32
  }
  func.func @transform_2(%arg0: i32, %arg1: i32) -> (i32, i32, i32) {
    %c0_i32 = arith.constant 0 : i32
    %c0_i32_0 = arith.constant 0 : i32
    %c0_i32_1 = arith.constant 0 : i32
    return %arg1, %c0_i32, %c0_i32_0 : i32, i32, i32
  }
  func.func @transform_3(%arg0: i32, %arg1: i32) -> (i32, i32, i32) {
    %c0_i32 = arith.constant 0 : i32
    %c0_i32_0 = arith.constant 0 : i32
    %c0_i32_1 = arith.constant 0 : i32
    return %arg1, %c0_i32, %c0_i32_0 : i32, i32, i32
  }
  func.func @transform_4(%arg0: i32, %arg1: i32) -> (i32, i32, i32) {
    %c0_i32 = arith.constant 0 : i32
    %c0_i32_0 = arith.constant 0 : i32
    %c0_i32_1 = arith.constant 0 : i32
    return %arg1, %c0_i32, %c0_i32_0 : i32, i32, i32
  }
  func.func @transform_5(%arg0: i32, %arg1: i32) -> (i32, i32, i32) {
    %c0_i32 = arith.constant 0 : i32
    %c0_i32_0 = arith.constant 0 : i32
    %c0_i32_1 = arith.constant 0 : i32
    return %arg1, %c0_i32, %c0_i32_0 : i32, i32, i32
  }
  func.func @transform_6(%arg0: i32, %arg1: i32) -> (i32, i32, i32) {
    %c0_i32 = arith.constant 0 : i32
    %c0_i32_0 = arith.constant 0 : i32
    %c0_i32_1 = arith.constant 0 : i32
    return %arg1, %c0_i32, %c0_i32_0 : i32, i32, i32
  }
  func.func @transform_7(%arg0: i32, %arg1: i32) -> (i32, i32, i32) {
    %c0_i32 = arith.constant 0 : i32
    %c0_i32_0 = arith.constant 0 : i32
    %c0_i32_1 = arith.constant 0 : i32
    return %arg1, %c0_i32, %c0_i32_0 : i32, i32, i32
  }
  func.func @transform_8(%arg0: i32, %arg1: i32) -> (i32, i32, i32) {
    %c0_i32 = arith.constant 0 : i32
    %c0_i32_0 = arith.constant 0 : i32
    %c0_i32_1 = arith.constant 0 : i32
    return %arg1, %c0_i32, %c0_i32_0 : i32, i32, i32
  }
  func.func @transform_9(%arg0: i32, %arg1: i32) -> (i32, i32, i32) {
    %c0_i32 = arith.constant 0 : i32
    %c0_i32_0 = arith.constant 0 : i32
    %c0_i32_1 = arith.constant 0 : i32
    return %arg1, %c0_i32, %c0_i32_0 : i32, i32, i32
  }
  func.func @transform_10(%arg0: i32, %arg1: i32) -> (i32, i32, i32) {
    %c0_i32 = arith.constant 0 : i32
    %c0_i32_0 = arith.constant 0 : i32
    %c0_i32_1 = arith.constant 0 : i32
    return %arg1, %c0_i32, %c0_i32_0 : i32, i32, i32
  }
  func.func @transform_11(%arg0: i32, %arg1: i32) -> (i32, i32, i32) {
    %c0_i32 = arith.constant 0 : i32
    %c0_i32_0 = arith.constant 0 : i32
    %c0_i32_1 = arith.constant 0 : i32
    return %arg1, %c0_i32, %c0_i32_0 : i32, i32, i32
  }
  func.func @transform_12(%arg0: i32, %arg1: i32) -> (i32, i32, i32) {
    %c0_i32 = arith.constant 0 : i32
    %c0_i32_0 = arith.constant 0 : i32
    %c0_i32_1 = arith.constant 0 : i32
    return %arg1, %c0_i32, %c0_i32_0 : i32, i32, i32
  }
  func.func @transform_13(%arg0: i32, %arg1: i32) -> (i32, i32, i32) {
    %c0_i32 = arith.constant 0 : i32
    %c0_i32_0 = arith.constant 0 : i32
    %c0_i32_1 = arith.constant 0 : i32
    return %arg1, %c0_i32, %c0_i32_0 : i32, i32, i32
  }
  func.func @transform_14(%arg0: i32, %arg1: i32) -> (i32, i32, i32) {
    %c0_i32 = arith.constant 0 : i32
    %c0_i32_0 = arith.constant 0 : i32
    %c0_i32_1 = arith.constant 0 : i32
    return %arg0, %c0_i32, %c0_i32_0 : i32, i32, i32
  }
}

</mosaic_0001>

<llo_original>
// kernel: tpu_custom_call.1
$region0: #{tpu_custom_call.1}
  #allocation0 [shape = 'u32[]', space=smem, size = 0x4, offset = 0x4, fixed_abs, tag = 'smem constant byte address 0x4 - core index']
  #allocation1 [shape = 'u32[144,128]{1,0:T(1,128)}', space=vmem, size = 0x12000, scoped, tag = 'internal scratch']
  #allocation2 [shape = 'f32[8,32]{1,0:T(8,128)}', space=vmem, size = 0x1000, scoped, tag = 'scratch operand']
  %s0 = inlined_call_operand.hbm [shape: f32[2,8,32], index: 0, kind: input, shape index: {}]
  %s1 = inlined_call_operand.hbm [shape: f32[8,32], index: 1, kind: input, shape index: {}]
  %s2 = inlined_call_operand.vmem [shape: bf16[2,32,96], index: 2, kind: input, shape index: {}]
  %s3 = inlined_call_operand.vmem [shape: f32[2,1,96], index: 3, kind: input, shape index: {}]
  %s4 = inlined_call_operand.vmem [shape: bf16[2,32,32], index: 4, kind: input, shape index: {}]
  %s5 = inlined_call_operand.vmem [shape: f32[2,1,32], index: 5, kind: input, shape index: {}]
  %s6 = inlined_call_operand.vmem [shape: f32[2,1,32], index: 6, kind: input, shape index: {}]
  %s7 = inlined_call_operand.vmem [shape: f32[2,1,32], index: 7, kind: input, shape index: {}]
  %s8 = inlined_call_operand.vmem [shape: bf16[2,32,64], index: 8, kind: input, shape index: {}]
  %s9 = inlined_call_operand.vmem [shape: f32[2,1,64], index: 9, kind: input, shape index: {}]
  %s10 = inlined_call_operand.vmem [shape: bf16[2,64,32], index: 10, kind: input, shape index: {}]
  %s11 = inlined_call_operand.vmem [shape: f32[2,1,32], index: 11, kind: input, shape index: {}]
  %s12 = inlined_call_operand.vmem [shape: f32[2,1,32], index: 12, kind: input, shape index: {}]
  %s13 = inlined_call_operand.vmem [shape: f32[2,1,32], index: 13, kind: input, shape index: {}]
  %s14 = inlined_call_operand.hbm [shape: f32[2,8,32], index: 14, kind: output, shape index: {}]
  %s15 = sld [smem:[#allocation0]]
  $region105: #{tpu_custom_call.1} parent=0
    _
  %s17 = ssub.s32 1, %s15
  %s18 = scalar_select 0, %s17, %s15
  $region1: #{tpu_custom_call.1} parent=0
    #allocation3 [shape = 'u8[8192]{0}', space=vmem, size = 0x2000, scoped, tag = 'input window, operand 0']
    #allocation4 [shape = 's32[2]{0}', space=sflag, size = 0x8, scoped, tag = 'scoped memory for tpu_custom_call.1']
    #allocation5 [shape = 's32[2]{0}', space=sflag, size = 0x8, scoped, tag = 'scoped memory for tpu_custom_call.1']
    #allocation6 [shape = 'u8[4096]{0}', space=vmem, size = 0x1000, scoped, tag = 'input window, operand 1, single buffered']
    #allocation7 [shape = 's32[1]{0}', space=sflag, size = 0x4, scoped, tag = 'scoped memory for tpu_custom_call.1']
    #allocation8 [shape = 'u8[8192]{0}', space=vmem, size = 0x2000, scoped, tag = 'output window, operand 0']
    %19 = vsyncpa [#allocation4], 0
    %s20 = scalar_lea.sflag [#allocation4], 1
    %21 = vsyncpa %s20, 0
    %22 = vsyncpa [#allocation7], 0
    %23 = vsyncpa [#allocation5], 0
    %s24 = scalar_lea.sflag [#allocation5], 1
    %25 = vsyncpa %s24, 0
    loop: start=0, step=1, limit=6
    $region2: #{tpu_custom_call.1} parent=1 // loop_pre_header
      _
    $region3: #{tpu_custom_call.1} parent=1 // loop_header
      %s27 = sphi 0, %s31
      %p28 = scmp.ge.s32.totalorder %s27, 6
      %s34 = sphi 0, %s46
      %s35 = sphi 0, %s42
      %s36 = sphi 0, %s34
      %s37 = sphi 0, %s35
      %s38 = sphi 0, %s36
      %s39 = sphi 0, %s37
      %s49 = sphi 0, %s51
      %s52 = sphi 0, %s49
      %s53 = sphi 0, %s52
      %s69 = sphi 0, %s53
      %s73 = sphi 0, %s73
      %s75 = sphi 0, %s73
      %s76 = sphi 0, %s75
      %s90 = sphi 0, %s76
      %s96 = sphi 0, %s98
      %s99 = sphi 0, %s96
      %s100 = sphi 0, %s99
      %s116 = sphi 0, %s100
      %s122 = sphi 0, %s124
      %s125 = sphi 0, %s122
      %s126 = sphi 0, %s125
      %s142 = sphi 0, %s126
      %s148 = sphi 0, %s150
      %s151 = sphi 0, %s148
      %s152 = sphi 0, %s151
      %s168 = sphi 0, %s152
      %s174 = sphi 0, %s176
      %s177 = sphi 0, %s174
      %s178 = sphi 0, %s177
      %s194 = sphi 0, %s178
      %s200 = sphi 0, %s202
      %s203 = sphi 0, %s200
      %s204 = sphi 0, %s203
      %s220 = sphi 0, %s204
      %s226 = sphi 0, %s228
      %s229 = sphi 0, %s226
      %s230 = sphi 0, %s229
      %s246 = sphi 0, %s230
      %s252 = sphi 0, %s254
      %s255 = sphi 0, %s252
      %s256 = sphi 0, %s255
      %s272 = sphi 0, %s256
      %s278 = sphi 0, %s280
      %s281 = sphi 0, %s278
      %s282 = sphi 0, %s281
      %s298 = sphi 0, %s282
      %s304 = sphi 0, %s306
      %s307 = sphi 0, %s304
      %s308 = sphi 0, %s307
      %s324 = sphi 0, %s308
      %s330 = sphi 0, %s332
      %s333 = sphi 0, %s330
      %s334 = sphi 0, %s333
      %s350 = sphi 0, %s334
      %s356 = sphi 0, %s358
      %s359 = sphi 0, %s356
      %s360 = sphi 0, %s359
      %s376 = sphi 0, %s360
      %s382 = sphi 0, %s384
      %s385 = sphi 0, %s382
      %s386 = sphi 0, %s385
      %s402 = sphi 0, %s386
      %s408 = sphi 0, %s410
      %s411 = sphi 0, %s408
      %s412 = sphi 0, %s411
      %s428 = sphi 0, %s412
    $region4: #{tpu_custom_call.1} parent=1 // loop_header_branch
      %30 = sbr.rel (%p28) target = $region8
    $region5: #{tpu_custom_call.1} parent=1 // loop_body
      %s32 = ssub.s32 %s27, 1
      %s33 = ssub.s32 %s27, 2
      %s40 = sadd.s32 1, %s35
      %p41 = scmp.ge.s32.totalorder %s40, 2
      %s42 = scalar_select %p41, 0, %s40
      %s43 = sadd.s32 1, %s34
      %s44 = scalar_select %p41, %s43, %s34
      %p45 = scmp.ge.s32.totalorder %s44, 2
      %s46 = scalar_select %p45, 0, %s44
      %s47 = ssub.s32 %s34, %s46
      %p48 = scmp.eq.s32.totalorder %s47, 0
      %s50 = sadd.s32 %s49, 1
      %s51 = scalar_select %p48, %s49, %s50
      %p54 = pneg %p48
      %p55 = scmp.eq.s32.totalorder %s27, 3
      %p56 = por %p54, %p55
      %p57 = scmp.ne.s32.totalorder %s49, %s52
      %p58 = scmp.eq.s32.totalorder %s27, 0
      %p59 = por %p57, %p58
      %p60 = scmp.ne.s32.totalorder %s49, %s52
      %p61 = scmp.eq.s32.totalorder %s32, 3
      %p62 = por %p60, %p61
      %p63 = scmp.ne.s32.totalorder %s52, %s53
      %p64 = scmp.eq.s32.totalorder %s32, 0
      %p65 = por %p63, %p64
      %p66 = scmp.ne.s32.totalorder %s52, %s53
      %p67 = scmp.eq.s32.totalorder %s33, 3
      %p68 = por %p66, %p67
      %p70 = scmp.ne.s32.totalorder %s53, %s69
      %p71 = scmp.eq.s32.totalorder %s33, 0
      %p72 = por %p70, %p71
      %s74 = sadd.s32 %s73, 1
      %p77 = scmp.eq.s32.totalorder %s27, 3
      %p78 = scmp.ne.s32.totalorder %s73, %s75
      %p79 = scmp.eq.s32.totalorder %s27, 0
      %p80 = por %p78, %p79
      %p81 = scmp.ne.s32.totalorder %s73, %s75
      %p82 = scmp.eq.s32.totalorder %s32, 3
      %p83 = por %p81, %p82
      %p84 = scmp.ne.s32.totalorder %s75, %s76
      %p85 = scmp.eq.s32.totalorder %s32, 0
      %p86 = por %p84, %p85
      %p87 = scmp.ne.s32.totalorder %s75, %s76
      %p88 = scmp.eq.s32.totalorder %s33, 3
      %p89 = por %p87, %p88
      %p91 = scmp.ne.s32.totalorder %s76, %s90
      %p92 = scmp.eq.s32.totalorder %s33, 0
      %p93 = por %p91, %p92
      %s94 = ssub.s32 %s35, %s42
      %p95 = scmp.eq.s32.totalorder %s94, 0
      %s97 = sadd.s32 %s96, 1
      %s98 = scalar_select %p95, %s96, %s97
      %p101 = pneg %p95
      %p102 = scmp.eq.s32.totalorder %s27, 3
      %p103 = por %p101, %p102
      %p104 = scmp.ne.s32.totalorder %s96, %s99
      %p105 = scmp.eq.s32.totalorder %s27, 0
      %p106 = por %p104, %p105
      %p107 = scmp.ne.s32.totalorder %s96, %s99
      %p108 = scmp.eq.s32.totalorder %s32, 3
      %p109 = por %p107, %p108
      %p110 = scmp.ne.s32.totalorder %s99, %s100
      %p111 = scmp.eq.s32.totalorder %s32, 0
      %p112 = por %p110, %p111
      %p113 = scmp.ne.s32.totalorder %s99, %s100
      %p114 = scmp.eq.s32.totalorder %s33, 3
      %p115 = por %p113, %p114
      %p117 = scmp.ne.s32.totalorder %s100, %s116
      %p118 = scmp.eq.s32.totalorder %s33, 0
      %p119 = por %p117, %p118
      %s120 = ssub.s32 %s35, %s42
      %p121 = scmp.eq.s32.totalorder %s120, 0
      %s123 = sadd.s32 %s122, 1
      %s124 = scalar_select %p121, %s122, %s123
      %p127 = pneg %p121
      %p128 = scmp.eq.s32.totalorder %s27, 3
      %p129 = por %p127, %p128
      %p130 = scmp.ne.s32.totalorder %s122, %s125
      %p131 = scmp.eq.s32.totalorder %s27, 0
      %p132 = por %p130, %p131
      %p133 = scmp.ne.s32.totalorder %s122, %s125
      %p134 = scmp.eq.s32.totalorder %s32, 3
      %p135 = por %p133, %p134
      %p136 = scmp.ne.s32.totalorder %s125, %s126
      %p137 = scmp.eq.s32.totalorder %s32, 0
      %p138 = por %p136, %p137
      %p139 = scmp.ne.s32.totalorder %s125, %s126
      %p140 = scmp.eq.s32.totalorder %s33, 3
      %p141 = por %p139, %p140
      %p143 = scmp.ne.s32.totalorder %s126, %s142
      %p144 = scmp.eq.s32.totalorder %s33, 0
      %p145 = por %p143, %p144
      %s146 = ssub.s32 %s35, %s42
      %p147 = scmp.eq.s32.totalorder %s146, 0
      %s149 = sadd.s32 %s148, 1
      %s150 = scalar_select %p147, %s148, %s149
      %p153 = pneg %p147
      %p154 = scmp.eq.s32.totalorder %s27, 3
      %p155 = por %p153, %p154
      %p156 = scmp.ne.s32.totalorder %s148, %s151
      %p157 = scmp.eq.s32.totalorder %s27, 0
      %p158 = por %p156, %p157
      %p159 = scmp.ne.s32.totalorder %s148, %s151
      %p160 = scmp.eq.s32.totalorder %s32, 3
      %p161 = por %p159, %p160
      %p162 = scmp.ne.s32.totalorder %s151, %s152
      %p163 = scmp.eq.s32.totalorder %s32, 0
      %p164 = por %p162, %p163
      %p165 = scmp.ne.s32.totalorder %s151, %s152
      %p166 = scmp.eq.s32.totalorder %s33, 3
      %p167 = por %p165, %p166
      %p169 = scmp.ne.s32.totalorder %s152, %s168
      %p170 = scmp.eq.s32.totalorder %s33, 0
      %p171 = por %p169, %p170
      %s172 = ssub.s32 %s35, %s42
      %p173 = scmp.eq.s32.totalorder %s172, 0
      %s175 = sadd.s32 %s174, 1
      %s176 = scalar_select %p173, %s174, %s175
      %p179 = pneg %p173
      %p180 = scmp.eq.s32.totalorder %s27, 3
      %p181 = por %p179, %p180
      %p182 = scmp.ne.s32.totalorder %s174, %s177
      %p183 = scmp.eq.s32.totalorder %s27, 0
      %p184 = por %p182, %p183
      %p185 = scmp.ne.s32.totalorder %s174, %s177
      %p186 = scmp.eq.s32.totalorder %s32, 3
      %p187 = por %p185, %p186
      %p188 = scmp.ne.s32.totalorder %s177, %s178
      %p189 = scmp.eq.s32.totalorder %s32, 0
      %p190 = por %p188, %p189
      %p191 = scmp.ne.s32.totalorder %s177, %s178
      %p192 = scmp.eq.s32.totalorder %s33, 3
      %p193 = por %p191, %p192
      %p195 = scmp.ne.s32.totalorder %s178, %s194
      %p196 = scmp.eq.s32.totalorder %s33, 0
      %p197 = por %p195, %p196
      %s198 = ssub.s32 %s35, %s42
      %p199 = scmp.eq.s32.totalorder %s198, 0
      %s201 = sadd.s32 %s200, 1
      %s202 = scalar_select %p199, %s200, %s201
      %p205 = pneg %p199
      %p206 = scmp.eq.s32.totalorder %s27, 3
      %p207 = por %p205, %p206
      %p208 = scmp.ne.s32.totalorder %s200, %s203
      %p209 = scmp.eq.s32.totalorder %s27, 0
      %p210 = por %p208, %p209
      %p211 = scmp.ne.s32.totalorder %s200, %s203
      %p212 = scmp.eq.s32.totalorder %s32, 3
      %p213 = por %p211, %p212
      %p214 = scmp.ne.s32.totalorder %s203, %s204
      %p215 = scmp.eq.s32.totalorder %s32, 0
      %p216 = por %p214, %p215
      %p217 = scmp.ne.s32.totalorder %s203, %s204
      %p218 = scmp.eq.s32.totalorder %s33, 3
      %p219 = por %p217, %p218
      %p221 = scmp.ne.s32.totalorder %s204, %s220
      %p222 = scmp.eq.s32.totalorder %s33, 0
      %p223 = por %p221, %p222
      %s224 = ssub.s32 %s35, %s42
      %p225 = scmp.eq.s32.totalorder %s224, 0
      %s227 = sadd.s32 %s226, 1
      %s228 = scalar_select %p225, %s226, %s227
      %p231 = pneg %p225
      %p232 = scmp.eq.s32.totalorder %s27, 3
      %p233 = por %p231, %p232
      %p234 = scmp.ne.s32.totalorder %s226, %s229
      %p235 = scmp.eq.s32.totalorder %s27, 0
      %p236 = por %p234, %p235
      %p237 = scmp.ne.s32.totalorder %s226, %s229
      %p238 = scmp.eq.s32.totalorder %s32, 3
      %p239 = por %p237, %p238
      %p240 = scmp.ne.s32.totalorder %s229, %s230
      %p241 = scmp.eq.s32.totalorder %s32, 0
      %p242 = por %p240, %p241
      %p243 = scmp.ne.s32.totalorder %s229, %s230
      %p244 = scmp.eq.s32.totalorder %s33, 3
      %p245 = por %p243, %p244
      %p247 = scmp.ne.s32.totalorder %s230, %s246
      %p248 = scmp.eq.s32.totalorder %s33, 0
      %p249 = por %p247, %p248
      %s250 = ssub.s32 %s35, %s42
      %p251 = scmp.eq.s32.totalorder %s250, 0
      %s253 = sadd.s32 %s252, 1
      %s254 = scalar_select %p251, %s252, %s253
      %p257 = pneg %p251
      %p258 = scmp.eq.s32.totalorder %s27, 3
      %p259 = por %p257, %p258
      %p260 = scmp.ne.s32.totalorder %s252, %s255
      %p261 = scmp.eq.s32.totalorder %s27, 0
      %p262 = por %p260, %p261
      %p263 = scmp.ne.s32.totalorder %s252, %s255
      %p264 = scmp.eq.s32.totalorder %s32, 3
      %p265 = por %p263, %p264
      %p266 = scmp.ne.s32.totalorder %s255, %s256
      %p267 = scmp.eq.s32.totalorder %s32, 0
      %p268 = por %p266, %p267
      %p269 = scmp.ne.s32.totalorder %s255, %s256
      %p270 = scmp.eq.s32.totalorder %s33, 3
      %p271 = por %p269, %p270
      %p273 = scmp.ne.s32.totalorder %s256, %s272
      %p274 = scmp.eq.s32.totalorder %s33, 0
      %p275 = por %p273, %p274
      %s276 = ssub.s32 %s35, %s42
      %p277 = scmp.eq.s32.totalorder %s276, 0
      %s279 = sadd.s32 %s278, 1
      %s280 = scalar_select %p277, %s278, %s279
      %p283 = pneg %p277
      %p284 = scmp.eq.s32.totalorder %s27, 3
      %p285 = por %p283, %p284
      %p286 = scmp.ne.s32.totalorder %s278, %s281
      %p287 = scmp.eq.s32.totalorder %s27, 0
      %p288 = por %p286, %p287
      %p289 = scmp.ne.s32.totalorder %s278, %s281
      %p290 = scmp.eq.s32.totalorder %s32, 3
      %p291 = por %p289, %p290
      %p292 = scmp.ne.s32.totalorder %s281, %s282
      %p293 = scmp.eq.s32.totalorder %s32, 0
      %p294 = por %p292, %p293
      %p295 = scmp.ne.s32.totalorder %s281, %s282
      %p296 = scmp.eq.s32.totalorder %s33, 3
      %p297 = por %p295, %p296
      %p299 = scmp.ne.s32.totalorder %s282, %s298
      %p300 = scmp.eq.s32.totalorder %s33, 0
      %p301 = por %p299, %p300
      %s302 = ssub.s32 %s35, %s42
      %p303 = scmp.eq.s32.totalorder %s302, 0
      %s305 = sadd.s32 %s304, 1
      %s306 = scalar_select %p303, %s304, %s305
      %p309 = pneg %p303
      %p310 = scmp.eq.s32.totalorder %s27, 3
      %p311 = por %p309, %p310
      %p312 = scmp.ne.s32.totalorder %s304, %s307
      %p313 = scmp.eq.s32.totalorder %s27, 0
      %p314 = por %p312, %p313
      %p315 = scmp.ne.s32.totalorder %s304, %s307
      %p316 = scmp.eq.s32.totalorder %s32, 3
      %p317 = por %p315, %p316
      %p318 = scmp.ne.s32.totalorder %s307, %s308
      %p319 = scmp.eq.s32.totalorder %s32, 0
      %p320 = por %p318, %p319
      %p321 = scmp.ne.s32.totalorder %s307, %s308
      %p322 = scmp.eq.s32.totalorder %s33, 3
      %p323 = por %p321, %p322
      %p325 = scmp.ne.s32.totalorder %s308, %s324
      %p326 = scmp.eq.s32.totalorder %s33, 0
      %p327 = por %p325, %p326
      %s328 = ssub.s32 %s35, %s42
      %p329 = scmp.eq.s32.totalorder %s328, 0
      %s331 = sadd.s32 %s330, 1
      %s332 = scalar_select %p329, %s330, %s331
      %p335 = pneg %p329
      %p336 = scmp.eq.s32.totalorder %s27, 3
      %p337 = por %p335, %p336
      %p338 = scmp.ne.s32.totalorder %s330, %s333
      %p339 = scmp.eq.s32.totalorder %s27, 0
      %p340 = por %p338, %p339
      %p341 = scmp.ne.s32.totalorder %s330, %s333
      %p342 = scmp.eq.s32.totalorder %s32, 3
      %p343 = por %p341, %p342
      %p344 = scmp.ne.s32.totalorder %s333, %s334
      %p345 = scmp.eq.s32.totalorder %s32, 0
      %p346 = por %p344, %p345
      %p347 = scmp.ne.s32.totalorder %s333, %s334
      %p348 = scmp.eq.s32.totalorder %s33, 3
      %p349 = por %p347, %p348
      %p351 = scmp.ne.s32.totalorder %s334, %s350
      %p352 = scmp.eq.s32.totalorder %s33, 0
      %p353 = por %p351, %p352
      %s354 = ssub.s32 %s35, %s42
      %p355 = scmp.eq.s32.totalorder %s354, 0
      %s357 = sadd.s32 %s356, 1
      %s358 = scalar_select %p355, %s356, %s357
      %p361 = pneg %p355
      %p362 = scmp.eq.s32.totalorder %s27, 3
      %p363 = por %p361, %p362
      %p364 = scmp.ne.s32.totalorder %s356, %s359
      %p365 = scmp.eq.s32.totalorder %s27, 0
      %p366 = por %p364, %p365
      %p367 = scmp.ne.s32.totalorder %s356, %s359
      %p368 = scmp.eq.s32.totalorder %s32, 3
      %p369 = por %p367, %p368
      %p370 = scmp.ne.s32.totalorder %s359, %s360
      %p371 = scmp.eq.s32.totalorder %s32, 0
      %p372 = por %p370, %p371
      %p373 = scmp.ne.s32.totalorder %s359, %s360
      %p374 = scmp.eq.s32.totalorder %s33, 3
      %p375 = por %p373, %p374
      %p377 = scmp.ne.s32.totalorder %s360, %s376
      %p378 = scmp.eq.s32.totalorder %s33, 0
      %p379 = por %p377, %p378
      %s380 = ssub.s32 %s35, %s42
      %p381 = scmp.eq.s32.totalorder %s380, 0
      %s383 = sadd.s32 %s382, 1
      %s384 = scalar_select %p381, %s382, %s383
      %p387 = pneg %p381
      %p388 = scmp.eq.s32.totalorder %s27, 3
      %p389 = por %p387, %p388
      %p390 = scmp.ne.s32.totalorder %s382, %s385
      %p391 = scmp.eq.s32.totalorder %s27, 0
      %p392 = por %p390, %p391
      %p393 = scmp.ne.s32.totalorder %s382, %s385
      %p394 = scmp.eq.s32.totalorder %s32, 3
      %p395 = por %p393, %p394
      %p396 = scmp.ne.s32.totalorder %s385, %s386
      %p397 = scmp.eq.s32.totalorder %s32, 0
      %p398 = por %p396, %p397
      %p399 = scmp.ne.s32.totalorder %s385, %s386
      %p400 = scmp.eq.s32.totalorder %s33, 3
      %p401 = por %p399, %p400
      %p403 = scmp.ne.s32.totalorder %s386, %s402
      %p404 = scmp.eq.s32.totalorder %s33, 0
      %p405 = por %p403, %p404
      %s406 = ssub.s32 %s34, %s46
      %p407 = scmp.eq.s32.totalorder %s406, 0
      %s409 = sadd.s32 %s408, 1
      %s410 = scalar_select %p407, %s408, %s409
      %p413 = pneg %p407
      %p414 = scmp.eq.s32.totalorder %s27, 3
      %p415 = por %p413, %p414
      %p416 = scmp.ne.s32.totalorder %s408, %s411
      %p417 = scmp.eq.s32.totalorder %s27, 0
      %p418 = por %p416, %p417
      %p419 = scmp.ne.s32.totalorder %s408, %s411
      %p420 = scmp.eq.s32.totalorder %s32, 3
      %p421 = por %p419, %p420
      %p422 = scmp.ne.s32.totalorder %s411, %s412
      %p423 = scmp.eq.s32.totalorder %s32, 0
      %p424 = por %p422, %p423
      %p425 = scmp.ne.s32.totalorder %s411, %s412
      %p426 = scmp.eq.s32.totalorder %s33, 3
      %p427 = por %p425, %p426
      %p429 = scmp.ne.s32.totalorder %s412, %s428
      %p430 = scmp.eq.s32.totalorder %s33, 0
      %p431 = por %p429, %p430
      %p432 = scmp.le.s32.totalorder 1, %s27
      %p433 = scmp.lt.s32.totalorder %s27, 5
      %p434 = pnand %p432, %p433
      %p435 = pneg %p434
      // Predicated region
      $region9: #{tpu_custom_call.1} parent=5 // pred_check
        _
      $region10: #{tpu_custom_call.1} parent=5 // pred_check_branch
        %437 = sbr.rel (%p434) target = $region12
      $region11: #{tpu_custom_call.1} parent=5 // pred_region
        %s438 = ssub.s32 %s27, 1
        // Predicated region
        $region13: #{tpu_custom_call.1} parent=11 // pred_check
          %p439 = pneg %p86
        $region14: #{tpu_custom_call.1} parent=11 // pred_check_branch
          %441 = sbr.rel (%p439) target = $region16
        $region15: #{tpu_custom_call.1} parent=11 // pred_region
          %s443 = ssub.s32 128, 128
          %444 = vsyncadd [#allocation7], %s443
          %s446 = sshll.u32 [#allocation6], 4
          %s447 = int_to_ptr.vmem [resolvable:$true] %s446
          %449 = dma.hbm_to_vmem [thread:$0]  %s1, 128, %s447, [#allocation7]
        $region16: #{tpu_custom_call.1} parent=11 // pred_fallthru
          _
      $region12: #{tpu_custom_call.1} parent=5 // pred_fallthru
        _
      %p450 = scmp.lt.s32.totalorder %s27, 4
      // Predicated region
      $region17: #{tpu_custom_call.1} parent=5 // pred_check
        %p451 = pneg %p450
      $region18: #{tpu_custom_call.1} parent=5 // pred_check_branch
        %453 = sbr.rel (%p451) target = $region20
      $region19: #{tpu_custom_call.1} parent=5 // pred_region
        // Predicated region
        $region21: #{tpu_custom_call.1} parent=19 // pred_check
          %p454 = pneg %p59
        $region22: #{tpu_custom_call.1} parent=19 // pred_check_branch
          %456 = sbr.rel (%p454) target = $region24
        $region23: #{tpu_custom_call.1} parent=19 // pred_region
          %s457 = sand.u32 %s49, 1
          %s458 = scalar_lea.sflag [#allocation4], %s457
          %s459 = sand.u32 %s49, 1
          %s460 = smul.addr %s459, 8
          %s461 = scalar_lea.vmem [#allocation3], %s460
          %s463 = ssub.s32 128, 128
          %464 = vsyncadd %s458, %s463
          %s465 = smul.addr %s34, 128
          %s466 = scalar_lea.hbm %s0, %s465
          %s468 = sshll.u32 %s461, 4
          %s469 = int_to_ptr.vmem [resolvable:$true] %s468
          %471 = dma.hbm_to_vmem [thread:$0]  %s466, 128, %s469, %s458
        $region24: #{tpu_custom_call.1} parent=19 // pred_fallthru
          _
        // Predicated region
        $region25: #{tpu_custom_call.1} parent=19 // pred_check
          %p472 = pneg %p106
        $region26: #{tpu_custom_call.1} parent=19 // pred_check_branch
          %474 = sbr.rel (%p472) target = $region28
        $region27: #{tpu_custom_call.1} parent=19 // pred_region
          %p475 = scmp.lt.s32.totalorder %s35, 1
          %s476 = scalar_select %p475, %s35, 1
          %s477 = smul.addr %s476, 4
          %s478 = smul.addr %s477, 4
          %s479 = scalar_lea.vmem %s2, %s478
        $region28: #{tpu_custom_call.1} parent=19 // pred_fallthru
          _
        // Predicated region
        $region29: #{tpu_custom_call.1} parent=19 // pred_check
          %p480 = pneg %p132
        $region30: #{tpu_custom_call.1} parent=19 // pred_check_branch
          %482 = sbr.rel (%p480) target = $region32
        $region31: #{tpu_custom_call.1} parent=19 // pred_region
          %p483 = scmp.lt.s32.totalorder %s35, 1
          %s484 = scalar_select %p483, %s35, 1
          %s485 = scalar_lea.vmem %s3, %s484
        $region32: #{tpu_custom_call.1} parent=19 // pred_fallthru
          _
        // Predicated region
        $region33: #{tpu_custom_call.1} parent=19 // pred_check
          %p486 = pneg %p158
        $region34: #{tpu_custom_call.1} parent=19 // pred_check_branch
          %488 = sbr.rel (%p486) target = $region36
        $region35: #{tpu_custom_call.1} parent=19 // pred_region
          %p489 = scmp.lt.s32.totalorder %s35, 1
          %s490 = scalar_select %p489, %s35, 1
          %s491 = smul.addr %s490, 4
          %s492 = smul.addr %s491, 4
          %s493 = scalar_lea.vmem %s4, %s492
        $region36: #{tpu_custom_call.1} parent=19 // pred_fallthru
          _
        // Predicated region
        $region37: #{tpu_custom_call.1} parent=19 // pred_check
          %p494 = pneg %p184
        $region38: #{tpu_custom_call.1} parent=19 // pred_check_branch
          %496 = sbr.rel (%p494) target = $region40
        $region39: #{tpu_custom_call.1} parent=19 // pred_region
          %p497 = scmp.lt.s32.totalorder %s35, 1
          %s498 = scalar_select %p497, %s35, 1
          %s499 = scalar_lea.vmem %s5, %s498
        $region40: #{tpu_custom_call.1} parent=19 // pred_fallthru
          _
        // Predicated region
        $region41: #{tpu_custom_call.1} parent=19 // pred_check
          %p500 = pneg %p210
        $region42: #{tpu_custom_call.1} parent=19 // pred_check_branch
          %502 = sbr.rel (%p500) target = $region44
        $region43: #{tpu_custom_call.1} parent=19 // pred_region
          %p503 = scmp.lt.s32.totalorder %s35, 1
          %s504 = scalar_select %p503, %s35, 1
          %s505 = scalar_lea.vmem %s6, %s504
        $region44: #{tpu_custom_call.1} parent=19 // pred_fallthru
          _
        // Predicated region
        $region45: #{tpu_custom_call.1} parent=19 // pred_check
          %p506 = pneg %p236
        $region46: #{tpu_custom_call.1} parent=19 // pred_check_branch
          %508 = sbr.rel (%p506) target = $region48
        $region47: #{tpu_custom_call.1} parent=19 // pred_region
          %p509 = scmp.lt.s32.totalorder %s35, 1
          %s510 = scalar_select %p509, %s35, 1
          %s511 = scalar_lea.vmem %s7, %s510
        $region48: #{tpu_custom_call.1} parent=19 // pred_fallthru
          _
        // Predicated region
        $region49: #{tpu_custom_call.1} parent=19 // pred_check
          %p512 = pneg %p262
        $region50: #{tpu_custom_call.1} parent=19 // pred_check_branch
          %514 = sbr.rel (%p512) target = $region52
        $region51: #{tpu_custom_call.1} parent=19 // pred_region
          %p515 = scmp.lt.s32.totalorder %s35, 1
          %s516 = scalar_select %p515, %s35, 1
          %s517 = smul.addr %s516, 4
          %s518 = smul.addr %s517, 4
          %s519 = scalar_lea.vmem %s8, %s518
        $region52: #{tpu_custom_call.1} parent=19 // pred_fallthru
          _
        // Predicated region
        $region53: #{tpu_custom_call.1} parent=19 // pred_check
          %p520 = pneg %p288
        $region54: #{tpu_custom_call.1} parent=19 // pred_check_branch
          %522 = sbr.rel (%p520) target = $region56
        $region55: #{tpu_custom_call.1} parent=19 // pred_region
          %p523 = scmp.lt.s32.totalorder %s35, 1
          %s524 = scalar_select %p523, %s35, 1
          %s525 = scalar_lea.vmem %s9, %s524
        $region56: #{tpu_custom_call.1} parent=19 // pred_fallthru
          _
        // Predicated region
        $region57: #{tpu_custom_call.1} parent=19 // pred_check
          %p526 = pneg %p314
        $region58: #{tpu_custom_call.1} parent=19 // pred_check_branch
          %528 = sbr.rel (%p526) target = $region60
        $region59: #{tpu_custom_call.1} parent=19 // pred_region
          %p529 = scmp.lt.s32.totalorder %s35, 1
          %s530 = scalar_select %p529, %s35, 1
          %s531 = smul.addr %s530, 8
          %s532 = smul.addr %s531, 4
          %s533 = scalar_lea.vmem %s10, %s532
        $region60: #{tpu_custom_call.1} parent=19 // pred_fallthru
          _
        // Predicated region
        $region61: #{tpu_custom_call.1} parent=19 // pred_check
          %p534 = pneg %p340
        $region62: #{tpu_custom_call.1} parent=19 // pred_check_branch
          %536 = sbr.rel (%p534) target = $region64
        $region63: #{tpu_custom_call.1} parent=19 // pred_region
          %p537 = scmp.lt.s32.totalorder %s35, 1
          %s538 = scalar_select %p537, %s35, 1
          %s539 = scalar_lea.vmem %s11, %s538
        $region64: #{tpu_custom_call.1} parent=19 // pred_fallthru
          _
        // Predicated region
        $region65: #{tpu_custom_call.1} parent=19 // pred_check
          %p540 = pneg %p366
        $region66: #{tpu_custom_call.1} parent=19 // pred_check_branch
          %542 = sbr.rel (%p540) target = $region68
        $region67: #{tpu_custom_call.1} parent=19 // pred_region
          %p543 = scmp.lt.s32.totalorder %s35, 1
          %s544 = scalar_select %p543, %s35, 1
          %s545 = scalar_lea.vmem %s12, %s544
        $region68: #{tpu_custom_call.1} parent=19 // pred_fallthru
          _
        // Predicated region
        $region69: #{tpu_custom_call.1} parent=19 // pred_check
          %p546 = pneg %p392
        $region70: #{tpu_custom_call.1} parent=19 // pred_check_branch
          %548 = sbr.rel (%p546) target = $region72
        $region71: #{tpu_custom_call.1} parent=19 // pred_region
          %p549 = scmp.lt.s32.totalorder %s35, 1
          %s550 = scalar_select %p549, %s35, 1
          %s551 = scalar_lea.vmem %s13, %s550
        $region72: #{tpu_custom_call.1} parent=19 // pred_fallthru
          _
      $region20: #{tpu_custom_call.1} parent=5 // pred_fallthru
        _
      %p552 = scmp.le.s32.totalorder 1, %s27
      %p553 = scmp.lt.s32.totalorder %s27, 5
      %p554 = pnand %p552, %p553
      %p555 = pneg %p554
      // Predicated region
      $region73: #{tpu_custom_call.1} parent=5 // pred_check
        _
      $region74: #{tpu_custom_call.1} parent=5 // pred_check_branch
        %557 = sbr.rel (%p554) target = $region76
      $region75: #{tpu_custom_call.1} parent=5 // pred_region
        %s558 = ssub.s32 %s27, 1
        %s559 = sand.u32 %s52, 1
        %s560 = scalar_lea.sflag [#allocation4], %s559
        %s561 = sand.u32 %s52, 1
        %s562 = smul.addr %s561, 8
        %s563 = scalar_lea.vmem [#allocation3], %s562
        // Predicated region
        $region77: #{tpu_custom_call.1} parent=75 // pred_check
          %p564 = pneg %p65
        $region78: #{tpu_custom_call.1} parent=75 // pred_check_branch
          %566 = sbr.rel (%p564) target = $region80
        $region79: #{tpu_custom_call.1} parent=75 // pred_region
          %567 = dma.done %s560, 128
        $region80: #{tpu_custom_call.1} parent=75 // pred_fallthru
          _
        // Predicated region
        $region81: #{tpu_custom_call.1} parent=75 // pred_check
          %p568 = pneg %p86
        $region82: #{tpu_custom_call.1} parent=75 // pred_check_branch
          %570 = sbr.rel (%p568) target = $region84
        $region83: #{tpu_custom_call.1} parent=75 // pred_region
          %571 = dma.done [#allocation7], 128
        $region84: #{tpu_custom_call.1} parent=75 // pred_fallthru
          _
        %s572 = sand.u32 %s52, 1
        %s573 = scalar_lea.sflag [#allocation4], %s572
        %s574 = sand.u32 %s52, 1
        %s575 = smul.addr %s574, 8
        %s576 = scalar_lea.vmem [#allocation3], %s575
        %p577 = pneg %p65
        %p578 = pneg %p62
        %p579 = pneg %p86
        %p580 = pneg %p83
        %p581 = scmp.lt.s32.totalorder %s37, 1
        %s582 = scalar_select %p581, %s37, 1
        %s583 = smul.addr %s582, 4
        %s584 = smul.addr %s583, 4
        %s585 = scalar_lea.vmem %s2, %s584
        %p586 = pneg %p112
        %p587 = pneg %p109
        %p588 = scmp.lt.s32.totalorder %s37, 1
        %s589 = scalar_select %p588, %s37, 1
        %s590 = scalar_lea.vmem %s3, %s589
        %p591 = pneg %p138
        %p592 = pneg %p135
        %p593 = scmp.lt.s32.totalorder %s37, 1
        %s594 = scalar_select %p593, %s37, 1
        %s595 = smul.addr %s594, 4
        %s596 = smul.addr %s595, 4
        %s597 = scalar_lea.vmem %s4, %s596
        %p598 = pneg %p164
        %p599 = pneg %p161
        %p600 = scmp.lt.s32.totalorder %s37, 1
        %s601 = scalar_select %p600, %s37, 1
        %s602 = scalar_lea.vmem %s5, %s601
        %p603 = pneg %p190
        %p604 = pneg %p187
        %p605 = scmp.lt.s32.totalorder %s37, 1
        %s606 = scalar_select %p605, %s37, 1
        %s607 = scalar_lea.vmem %s6, %s606
        %p608 = pneg %p216
        %p609 = pneg %p213
        %p610 = scmp.lt.s32.totalorder %s37, 1
        %s611 = scalar_select %p610, %s37, 1
        %s612 = scalar_lea.vmem %s7, %s611
        %p613 = pneg %p242
        %p614 = pneg %p239
        %p615 = scmp.lt.s32.totalorder %s37, 1
        %s616 = scalar_select %p615, %s37, 1
        %s617 = smul.addr %s616, 4
        %s618 = smul.addr %s617, 4
        %s619 = scalar_lea.vmem %s8, %s618
        %p620 = pneg %p268
        %p621 = pneg %p265
        %p622 = scmp.lt.s32.totalorder %s37, 1
        %s623 = scalar_select %p622, %s37, 1
        %s624 = scalar_lea.vmem %s9, %s623
        %p625 = pneg %p294
        %p626 = pneg %p291
        %p627 = scmp.lt.s32.totalorder %s37, 1
        %s628 = scalar_select %p627, %s37, 1
        %s629 = smul.addr %s628, 8
        %s630 = smul.addr %s629, 4
        %s631 = scalar_lea.vmem %s10, %s630
        %p632 = pneg %p320
        %p633 = pneg %p317
        %p634 = scmp.lt.s32.totalorder %s37, 1
        %s635 = scalar_select %p634, %s37, 1
        %s636 = scalar_lea.vmem %s11, %s635
        %p637 = pneg %p346
        %p638 = pneg %p343
        %p639 = scmp.lt.s32.totalorder %s37, 1
        %s640 = scalar_select %p639, %s37, 1
        %s641 = scalar_lea.vmem %s12, %s640
        %p642 = pneg %p372
        %p643 = pneg %p369
        %p644 = scmp.lt.s32.totalorder %s37, 1
        %s645 = scalar_select %p644, %s37, 1
        %s646 = scalar_lea.vmem %s13, %s645
        %p647 = pneg %p398
        %p648 = pneg %p395
        %p649 = pneg %p424
        %p650 = pneg %p421
        %s651 = sand.u32 %s411, 1
        %s652 = scalar_lea.sflag [#allocation5], %s651
        %s653 = sand.u32 %s411, 1
        %s654 = smul.addr %s653, 8
        %s655 = scalar_lea.vmem [#allocation8], %s654
        %p656 = scmp.lt.s32.totalorder %s37, 1
        %s657 = scalar_select %p656, %s37, 1
        %s658 = smul.addr %s657, 4
        %s659 = smul.addr %s658, 4
        %s660 = scalar_lea.vmem %s2, %s659
        %p661 = scmp.lt.s32.totalorder %s37, 1
        %s662 = scalar_select %p661, %s37, 1
        %s663 = scalar_lea.vmem %s3, %s662
        %p664 = scmp.lt.s32.totalorder %s37, 1
        %s665 = scalar_select %p664, %s37, 1
        %s666 = smul.addr %s665, 4
        %s667 = smul.addr %s666, 4
        %s668 = scalar_lea.vmem %s4, %s667
        %p669 = scmp.lt.s32.totalorder %s37, 1
        %s670 = scalar_select %p669, %s37, 1
        %s671 = scalar_lea.vmem %s5, %s670
        %p672 = scmp.lt.s32.totalorder %s37, 1
        %s673 = scalar_select %p672, %s37, 1
        %s674 = scalar_lea.vmem %s6, %s673
        %p675 = scmp.lt.s32.totalorder %s37, 1
        %s676 = scalar_select %p675, %s37, 1
        %s677 = scalar_lea.vmem %s7, %s676
        %p678 = scmp.lt.s32.totalorder %s37, 1
        %s679 = scalar_select %p678, %s37, 1
        %s680 = smul.addr %s679, 4
        %s681 = smul.addr %s680, 4
        %s682 = scalar_lea.vmem %s8, %s681
        %p683 = scmp.lt.s32.totalorder %s37, 1
        %s684 = scalar_select %p683, %s37, 1
        %s685 = scalar_lea.vmem %s9, %s684
        %p686 = scmp.lt.s32.totalorder %s37, 1
        %s687 = scalar_select %p686, %s37, 1
        %s688 = smul.addr %s687, 8
        %s689 = smul.addr %s688, 4
        %s690 = scalar_lea.vmem %s10, %s689
        %p691 = scmp.lt.s32.totalorder %s37, 1
        %s692 = scalar_select %p691, %s37, 1
        %s693 = scalar_lea.vmem %s11, %s692
        %p694 = scmp.lt.s32.totalorder %s37, 1
        %s695 = scalar_select %p694, %s37, 1
        %s696 = scalar_lea.vmem %s12, %s695
        %p697 = scmp.lt.s32.totalorder %s37, 1
        %s698 = scalar_select %p697, %s37, 1
        %s699 = scalar_lea.vmem %s13, %s698
        %p701 = scmp.eq.s32.totalorder %s37, 0
        // Predicated region
        $region85: #{tpu_custom_call.1} parent=75 // pred_check
          %p702 = pneg %p701
        $region86: #{tpu_custom_call.1} parent=75 // pred_check_branch
          %704 = sbr.rel (%p702) target = $region88
        $region87: #{tpu_custom_call.1} parent=75 // pred_region
          %v705 = vld [vmem:[%s563] sm:$0xff]
          %v706 = vmul.f32 %v705, 5.656854
          %v707 = vld [vmem:[#allocation6] sm:$0xff]
          %v708 = vadd.f32 %v706, %v707
          %vm709 = vcmask 261120
          %710 = vst.msk [vmem:[#allocation2] sm:$0xff] %vm709, %v708
        $region88: #{tpu_custom_call.1} parent=75 // pred_fallthru
          _
        %v711 = vld [vmem:[#allocation2] sm:$0xff]
        %v712 = vpack.c.bf16 %v711, %v711
        %v713 = vld [vmem:[%s660] sm:$0xf]
        %v714 = vld [vmem:[%s660 + $0x4] sm:$0xf]
        %v715 = vld [vmem:[%s660 + $0x8] sm:$0xf]
        %v716 = vld [vmem:[%s660 + $0xc] sm:$0xf]
        %v717 = vld [vmem:[%s663] sm:$0x1]
        %v719 = vlaneseq
        %v720 = vshrl.u32 %v719, 7
        %v721 = vsub.s32 0, %v720
        %v722 = vrot.slane %v717, %v721
        %v728 = vunpack.c.l.b16 %v713
        %v729 = vunpack.c.l.b16 %v714
        %v730 = vunpack.c.l.b16 %v715
        %v731 = vunpack.c.l.b16 %v716
        %v732 = vpack.c.b16 %v729, %v728
        %v733 = vpack.c.b16 %v731, %v730
        %vm736 = vcmask 261120
        %v738 = vsel %vm736, %v712, 0
        %740 = vmatprep.subr.bf16.mxu0 0
        %741 = vmatpush1.bf16.msra.mxu0 0
        %742 = vmatprep.subr.bf16.mxu0 0
        %743 = vmatpush1.bf16.msra.mxu0 0
        %744 = vmatprep.subr.bf16.mxu0 0
        %745 = vmatpush1.bf16.msra.mxu0 0
        %746 = vmatprep.subr.bf16.mxu0 0
        %747 = vmatpush1.bf16.msra.mxu0 0
        %748 = vmatprep.subr.bf16.mxu0 0
        %749 = vmatpush1.bf16.msra.mxu0 0
        %750 = vmatprep.subr.bf16.mxu0 0
        %751 = vmatpush1.bf16.msra.mxu0 0
        %752 = vmatprep.subr.bf16.mxu0 0
        %753 = vmatpush1.bf16.msra.mxu0 %v733
        %754 = vmatprep.subr.bf16.mxu0 0
        %755 = vmatpush1.bf16.msra.mxu0 %v732
        %756 = vmatprep.subr.bf16.mxu0 0
        %757 = vmatpush2.bf16.msra.mxu0 0
        %758 = vmatprep.subr.bf16.mxu0 0
        %759 = vmatpush2.bf16.msra.mxu0 0
        %760 = vmatprep.subr.bf16.mxu0 0
        %761 = vmatpush2.bf16.msra.mxu0 0
        %762 = vmatprep.subr.bf16.mxu0 0
        %763 = vmatpush2.bf16.msra.mxu0 0
        %764 = vmatprep.subr.bf16.mxu0 0
        %765 = vmatpush2.bf16.msra.mxu0 0
        %766 = vmatprep.subr.bf16.mxu0 0
        %767 = vmatpush2.bf16.msra.mxu0 0
        %768 = vmatprep.subr.bf16.mxu0 0
        %769 = vmatpush2.bf16.msra.mxu0 0
        %770 = vmatprep.subr.bf16.mxu0 0
        %771 = vmatpush2.bf16.msra.mxu0 0
        %772 = vmatprep.mubr.bf16.mxu0 0
        %773 = vmatmul.mubr.bf16.gmra.mxu0 %v738
        %v774 = vpop.f32.mrf.mxu0
        %v775 = vadd.f32 %v722, %v774
        %v776 = vpop.f32.mrf.mxu0
        %v777 = vpop.f32.mrf.mxu0
        %v778 = vpop.f32.mrf.mxu0
        %779 = vdwg.mxu0
        %781 = vrot.lane.b32.xlu0 %v775, 120
        %v782 = vpop.permute.xlu0 %781
        %784 = vrot.lane.b32.xlu0 %v775, 112
        %v785 = vpop.permute.xlu0 %784
        %787 = vrot.lane.b32.xlu0 %v775, 104
        %v788 = vpop.permute.xlu0 %787
        %v790 = vcombine.low %v775, %v785
        %v791 = vcombine.high %v775, %v785
        %v793 = vunpack.c.l.s4 1983009808
        %v794 = vunpack.c.0.s8 %v793
        %v795 = vlaneseq
        %v796 = vshrl.u32 %v795, 7
        %v797 = vsub.s32 %v794, %v796
        %v798 = vrot.slane %v790, %v797
        %v800 = vunpack.c.l.s4 1983009808
        %v801 = vunpack.c.0.s8 %v800
        %v802 = vlaneseq
        %v803 = vshrl.u32 %v802, 7
        %v804 = vsub.s32 %v801, %v803
        %v805 = vrot.slane %v791, %v804
        %v806 = vcombine.low %v782, %v788
        %v807 = vcombine.high %v782, %v788
        %v809 = vunpack.c.l.s4 1983009808
        %v810 = vunpack.c.0.s8 %v809
        %v811 = vlaneseq
        %v812 = vshrl.u32 %v811, 7
        %v813 = vsub.s32 %v810, %v812
        %v814 = vrot.slane %v806, %v813
        %v816 = vunpack.c.l.s4 1983009808
        %v817 = vunpack.c.0.s8 %v816
        %v818 = vlaneseq
        %v819 = vshrl.u32 %v818, 7
        %v820 = vsub.s32 %v817, %v819
        %v821 = vrot.slane %v807, %v820
        %v822 = vcombine.low %v798, %v814
        %v823 = vcombine.high %v798, %v814
        %v825 = vunpack.c.l.s4 1934713408
        %v826 = vunpack.c.0.s8 %v825
        %v827 = vlaneseq
        %v828 = vshrl.u32 %v827, 7
        %v829 = vsub.s32 %v826, %v828
        %v830 = vrot.slane %v822, %v829
        %v832 = vunpack.c.l.s4 1934713408
        %v833 = vunpack.c.0.s8 %v832
        %v834 = vlaneseq
        %v835 = vshrl.u32 %v834, 7
        %v836 = vsub.s32 %v833, %v835
        %v837 = vrot.slane %v823, %v836
        %v838 = vcombine.low %v805, %v821
        %v839 = vcombine.high %v805, %v821
        %v841 = vunpack.c.l.s4 1934713408
        %v842 = vunpack.c.0.s8 %v841
        %v843 = vlaneseq
        %v844 = vshrl.u32 %v843, 7
        %v845 = vsub.s32 %v842, %v844
        %v846 = vrot.slane %v838, %v845
        %v848 = vunpack.c.l.s4 1934713408
        %v849 = vunpack.c.0.s8 %v848
        %v850 = vlaneseq
        %v851 = vshrl.u32 %v850, 7
        %v852 = vsub.s32 %v849, %v851
        %v853 = vrot.slane %v839, %v852
        %v854 = vcombine.high %v830, 0.0
        %v855 = vcombine.high %v837, 0.0
        %v856 = vcombine.high %v846, 0.0
        %v857 = vcombine.high %v853, 0.0
        %v858 = vcombine.low %v830, %v837
        %v860 = vunpack.c.l.s4 1983009808
        %v861 = vunpack.c.0.s8 %v860
        %v862 = vlaneseq
        %v863 = vshrl.u32 %v862, 7
        %v864 = vsub.s32 %v861, %v863
        %v865 = vrot.slane %v858, %v864
        %v866 = vcombine.low %v854, %v855
        %v868 = vunpack.c.l.s4 1983009808
        %v869 = vunpack.c.0.s8 %v868
        %v870 = vlaneseq
        %v871 = vshrl.u32 %v870, 7
        %v872 = vsub.s32 %v869, %v871
        %v873 = vrot.slane %v866, %v872
        %v874 = vcombine.low %v846, %v853
        %v876 = vunpack.c.l.s4 1983009808
        %v877 = vunpack.c.0.s8 %v876
        %v878 = vlaneseq
        %v879 = vshrl.u32 %v878, 7
        %v880 = vsub.s32 %v877, %v879
        %v881 = vrot.slane %v874, %v880
        %v882 = vcombine.low %v856, %v857
        %v884 = vunpack.c.l.s4 1983009808
        %v885 = vunpack.c.0.s8 %v884
        %v886 = vlaneseq
        %v887 = vshrl.u32 %v886, 7
        %v888 = vsub.s32 %v885, %v887
        %v889 = vrot.slane %v882, %v888
        %v890 = vcombine.low %v865, %v873
        %v891 = vcombine.high %v865, %v873
        %v893 = vunpack.c.l.s4 1934713408
        %v894 = vunpack.c.0.s8 %v893
        %v895 = vlaneseq
        %v896 = vshrl.u32 %v895, 7
        %v897 = vsub.s32 %v894, %v896
        %v898 = vrot.slane %v890, %v897
        %v900 = vunpack.c.l.s4 1934713408
        %v901 = vunpack.c.0.s8 %v900
        %v902 = vlaneseq
        %v903 = vshrl.u32 %v902, 7
        %v904 = vsub.s32 %v901, %v903
        %v905 = vrot.slane %v891, %v904
        %v906 = vcombine.low %v881, %v889
        %v907 = vcombine.high %v881, %v889
        %v909 = vunpack.c.l.s4 1934713408
        %v910 = vunpack.c.0.s8 %v909
        %v911 = vlaneseq
        %v912 = vshrl.u32 %v911, 7
        %v913 = vsub.s32 %v910, %v912
        %v914 = vrot.slane %v906, %v913
        %v916 = vunpack.c.l.s4 1934713408
        %v917 = vunpack.c.0.s8 %v916
        %v918 = vlaneseq
        %v919 = vshrl.u32 %v918, 7
        %v920 = vsub.s32 %v917, %v919
        %v921 = vrot.slane %v907, %v920
        %v922 = vcombine.low %v898, %v914
        %v923 = vcombine.high %v898, %v914
        %v924 = vcombine.low %v905, %v921
        %v925 = vcombine.high %v905, %v921
        %v926 = vpack.c.bf16 %v922, %v922
        %v927 = vpack.c.bf16 %v923, %v923
        %v928 = vpack.c.bf16 %v924, %v924
        %v929 = vpack.c.bf16 %v925, %v925
        %930 = vrot.lane.b32.xlu0 %v775, 96
        %v931 = vpop.permute.xlu0 %930
        %932 = vrot.lane.b32.xlu0 %v782, 96
        %v933 = vpop.permute.xlu0 %932
        %934 = vrot.lane.b32.xlu0 %v785, 96
        %v935 = vpop.permute.xlu0 %934
        %936 = vrot.lane.b32.xlu0 %v788, 96
        %v937 = vpop.permute.xlu0 %936
        %v942 = vcombine.low %v931, %v935
        %v943 = vcombine.high %v931, %v935
        %v945 = vunpack.c.l.s4 1983009808
        %v946 = vunpack.c.0.s8 %v945
        %v947 = vlaneseq
        %v948 = vshrl.u32 %v947, 7
        %v949 = vsub.s32 %v946, %v948
        %v950 = vrot.slane %v942, %v949
        %v952 = vunpack.c.l.s4 1983009808
        %v953 = vunpack.c.0.s8 %v952
        %v954 = vlaneseq
        %v955 = vshrl.u32 %v954, 7
        %v956 = vsub.s32 %v953, %v955
        %v957 = vrot.slane %v943, %v956
        %v958 = vcombine.low %v933, %v937
        %v959 = vcombine.high %v933, %v937
        %v961 = vunpack.c.l.s4 1983009808
        %v962 = vunpack.c.0.s8 %v961
        %v963 = vlaneseq
        %v964 = vshrl.u32 %v963, 7
        %v965 = vsub.s32 %v962, %v964
        %v966 = vrot.slane %v958, %v965
        %v968 = vunpack.c.l.s4 1983009808
        %v969 = vunpack.c.0.s8 %v968
        %v970 = vlaneseq
        %v971 = vshrl.u32 %v970, 7
        %v972 = vsub.s32 %v969, %v971
        %v973 = vrot.slane %v959, %v972
        %v974 = vcombine.low %v950, %v966
        %v975 = vcombine.high %v950, %v966
        %v977 = vunpack.c.l.s4 1934713408
        %v978 = vunpack.c.0.s8 %v977
        %v979 = vlaneseq
        %v980 = vshrl.u32 %v979, 7
        %v981 = vsub.s32 %v978, %v980
        %v982 = vrot.slane %v974, %v981
        %v984 = vunpack.c.l.s4 1934713408
        %v985 = vunpack.c.0.s8 %v984
        %v986 = vlaneseq
        %v987 = vshrl.u32 %v986, 7
        %v988 = vsub.s32 %v985, %v987
        %v989 = vrot.slane %v975, %v988
        %v990 = vcombine.low %v957, %v973
        %v991 = vcombine.high %v957, %v973
        %v993 = vunpack.c.l.s4 1934713408
        %v994 = vunpack.c.0.s8 %v993
        %v995 = vlaneseq
        %v996 = vshrl.u32 %v995, 7
        %v997 = vsub.s32 %v994, %v996
        %v998 = vrot.slane %v990, %v997
        %v1000 = vunpack.c.l.s4 1934713408
        %v1001 = vunpack.c.0.s8 %v1000
        %v1002 = vlaneseq
        %v1003 = vshrl.u32 %v1002, 7
        %v1004 = vsub.s32 %v1001, %v1003
        %v1005 = vrot.slane %v991, %v1004
        %v1006 = vcombine.high %v982, 0.0
        %v1007 = vcombine.high %v989, 0.0
        %v1008 = vcombine.high %v998, 0.0
        %v1009 = vcombine.high %v1005, 0.0
        %v1010 = vcombine.low %v982, %v989
        %v1012 = vunpack.c.l.s4 1983009808
        %v1013 = vunpack.c.0.s8 %v1012
        %v1014 = vlaneseq
        %v1015 = vshrl.u32 %v1014, 7
        %v1016 = vsub.s32 %v1013, %v1015
        %v1017 = vrot.slane %v1010, %v1016
        %v1018 = vcombine.low %v1006, %v1007
        %v1020 = vunpack.c.l.s4 1983009808
        %v1021 = vunpack.c.0.s8 %v1020
        %v1022 = vlaneseq
        %v1023 = vshrl.u32 %v1022, 7
        %v1024 = vsub.s32 %v1021, %v1023
        %v1025 = vrot.slane %v1018, %v1024
        %v1026 = vcombine.low %v998, %v1005
        %v1028 = vunpack.c.l.s4 1983009808
        %v1029 = vunpack.c.0.s8 %v1028
        %v1030 = vlaneseq
        %v1031 = vshrl.u32 %v1030, 7
        %v1032 = vsub.s32 %v1029, %v1031
        %v1033 = vrot.slane %v1026, %v1032
        %v1034 = vcombine.low %v1008, %v1009
        %v1036 = vunpack.c.l.s4 1983009808
        %v1037 = vunpack.c.0.s8 %v1036
        %v1038 = vlaneseq
        %v1039 = vshrl.u32 %v1038, 7
        %v1040 = vsub.s32 %v1037, %v1039
        %v1041 = vrot.slane %v1034, %v1040
        %v1042 = vcombine.low %v1017, %v1025
        %v1043 = vcombine.high %v1017, %v1025
        %v1045 = vunpack.c.l.s4 1934713408
        %v1046 = vunpack.c.0.s8 %v1045
        %v1047 = vlaneseq
        %v1048 = vshrl.u32 %v1047, 7
        %v1049 = vsub.s32 %v1046, %v1048
        %v1050 = vrot.slane %v1042, %v1049
        %v1052 = vunpack.c.l.s4 1934713408
        %v1053 = vunpack.c.0.s8 %v1052
        %v1054 = vlaneseq
        %v1055 = vshrl.u32 %v1054, 7
        %v1056 = vsub.s32 %v1053, %v1055
        %v1057 = vrot.slane %v1043, %v1056
        %v1058 = vcombine.low %v1033, %v1041
        %v1059 = vcombine.high %v1033, %v1041
        %v1061 = vunpack.c.l.s4 1934713408
        %v1062 = vunpack.c.0.s8 %v1061
        %v1063 = vlaneseq
        %v1064 = vshrl.u32 %v1063, 7
        %v1065 = vsub.s32 %v1062, %v1064
        %v1066 = vrot.slane %v1058, %v1065
        %v1068 = vunpack.c.l.s4 1934713408
        %v1069 = vunpack.c.0.s8 %v1068
        %v1070 = vlaneseq
        %v1071 = vshrl.u32 %v1070, 7
        %v1072 = vsub.s32 %v1069, %v1071
        %v1073 = vrot.slane %v1059, %v1072
        %v1074 = vcombine.low %v1050, %v1066
        %v1075 = vcombine.high %v1050, %v1066
        %v1076 = vcombine.low %v1057, %v1073
        %v1077 = vcombine.high %v1057, %v1073
        %v1078 = vpack.c.bf16 %v1074, %v1074
        %v1079 = vpack.c.bf16 %v1075, %v1075
        %v1080 = vpack.c.bf16 %v1076, %v1076
        %v1081 = vpack.c.bf16 %v1077, %v1077
        %1082 = vrot.lane.b32.xlu0 %v775, 64
        %v1083 = vpop.permute.xlu0 %1082
        %1084 = vrot.lane.b32.xlu0 %v782, 64
        %v1085 = vpop.permute.xlu0 %1084
        %1086 = vrot.lane.b32.xlu0 %v785, 64
        %v1087 = vpop.permute.xlu0 %1086
        %1088 = vrot.lane.b32.xlu0 %v788, 64
        %v1089 = vpop.permute.xlu0 %1088
        %v1094 = vcombine.low %v1083, %v1087
        %v1095 = vcombine.high %v1083, %v1087
        %v1097 = vunpack.c.l.s4 1983009808
        %v1098 = vunpack.c.0.s8 %v1097
        %v1099 = vlaneseq
        %v1100 = vshrl.u32 %v1099, 7
        %v1101 = vsub.s32 %v1098, %v1100
        %v1102 = vrot.slane %v1094, %v1101
        %v1104 = vunpack.c.l.s4 1983009808
        %v1105 = vunpack.c.0.s8 %v1104
        %v1106 = vlaneseq
        %v1107 = vshrl.u32 %v1106, 7
        %v1108 = vsub.s32 %v1105, %v1107
        %v1109 = vrot.slane %v1095, %v1108
        %v1110 = vcombine.low %v1085, %v1089
        %v1111 = vcombine.high %v1085, %v1089
        %v1113 = vunpack.c.l.s4 1983009808
        %v1114 = vunpack.c.0.s8 %v1113
        %v1115 = vlaneseq
        %v1116 = vshrl.u32 %v1115, 7
        %v1117 = vsub.s32 %v1114, %v1116
        %v1118 = vrot.slane %v1110, %v1117
        %v1120 = vunpack.c.l.s4 1983009808
        %v1121 = vunpack.c.0.s8 %v1120
        %v1122 = vlaneseq
        %v1123 = vshrl.u32 %v1122, 7
        %v1124 = vsub.s32 %v1121, %v1123
        %v1125 = vrot.slane %v1111, %v1124
        %v1126 = vcombine.low %v1102, %v1118
        %v1127 = vcombine.high %v1102, %v1118
        %v1129 = vunpack.c.l.s4 1934713408
        %v1130 = vunpack.c.0.s8 %v1129
        %v1131 = vlaneseq
        %v1132 = vshrl.u32 %v1131, 7
        %v1133 = vsub.s32 %v1130, %v1132
        %v1134 = vrot.slane %v1126, %v1133
        %v1136 = vunpack.c.l.s4 1934713408
        %v1137 = vunpack.c.0.s8 %v1136
        %v1138 = vlaneseq
        %v1139 = vshrl.u32 %v1138, 7
        %v1140 = vsub.s32 %v1137, %v1139
        %v1141 = vrot.slane %v1127, %v1140
        %v1142 = vcombine.low %v1109, %v1125
        %v1143 = vcombine.high %v1109, %v1125
        %v1145 = vunpack.c.l.s4 1934713408
        %v1146 = vunpack.c.0.s8 %v1145
        %v1147 = vlaneseq
        %v1148 = vshrl.u32 %v1147, 7
        %v1149 = vsub.s32 %v1146, %v1148
        %v1150 = vrot.slane %v1142, %v1149
        %v1152 = vunpack.c.l.s4 1934713408
        %v1153 = vunpack.c.0.s8 %v1152
        %v1154 = vlaneseq
        %v1155 = vshrl.u32 %v1154, 7
        %v1156 = vsub.s32 %v1153, %v1155
        %v1157 = vrot.slane %v1143, %v1156
        %v1158 = vcombine.high %v1134, 0.0
        %v1159 = vcombine.high %v1141, 0.0
        %v1160 = vcombine.high %v1150, 0.0
        %v1161 = vcombine.high %v1157, 0.0
        %v1162 = vcombine.low %v1134, %v1141
        %v1164 = vunpack.c.l.s4 1983009808
        %v1165 = vunpack.c.0.s8 %v1164
        %v1166 = vlaneseq
        %v1167 = vshrl.u32 %v1166, 7
        %v1168 = vsub.s32 %v1165, %v1167
        %v1169 = vrot.slane %v1162, %v1168
        %v1170 = vcombine.low %v1158, %v1159
        %v1172 = vunpack.c.l.s4 1983009808
        %v1173 = vunpack.c.0.s8 %v1172
        %v1174 = vlaneseq
        %v1175 = vshrl.u32 %v1174, 7
        %v1176 = vsub.s32 %v1173, %v1175
        %v1177 = vrot.slane %v1170, %v1176
        %v1178 = vcombine.low %v1150, %v1157
        %v1180 = vunpack.c.l.s4 1983009808
        %v1181 = vunpack.c.0.s8 %v1180
        %v1182 = vlaneseq
        %v1183 = vshrl.u32 %v1182, 7
        %v1184 = vsub.s32 %v1181, %v1183
        %v1185 = vrot.slane %v1178, %v1184
        %v1186 = vcombine.low %v1160, %v1161
        %v1188 = vunpack.c.l.s4 1983009808
        %v1189 = vunpack.c.0.s8 %v1188
        %v1190 = vlaneseq
        %v1191 = vshrl.u32 %v1190, 7
        %v1192 = vsub.s32 %v1189, %v1191
        %v1193 = vrot.slane %v1186, %v1192
        %v1194 = vcombine.low %v1169, %v1177
        %v1195 = vcombine.high %v1169, %v1177
        %v1197 = vunpack.c.l.s4 1934713408
        %v1198 = vunpack.c.0.s8 %v1197
        %v1199 = vlaneseq
        %v1200 = vshrl.u32 %v1199, 7
        %v1201 = vsub.s32 %v1198, %v1200
        %v1202 = vrot.slane %v1194, %v1201
        %v1204 = vunpack.c.l.s4 1934713408
        %v1205 = vunpack.c.0.s8 %v1204
        %v1206 = vlaneseq
        %v1207 = vshrl.u32 %v1206, 7
        %v1208 = vsub.s32 %v1205, %v1207
        %v1209 = vrot.slane %v1195, %v1208
        %v1210 = vcombine.low %v1185, %v1193
        %v1211 = vcombine.high %v1185, %v1193
        %v1213 = vunpack.c.l.s4 1934713408
        %v1214 = vunpack.c.0.s8 %v1213
        %v1215 = vlaneseq
        %v1216 = vshrl.u32 %v1215, 7
        %v1217 = vsub.s32 %v1214, %v1216
        %v1218 = vrot.slane %v1210, %v1217
        %v1220 = vunpack.c.l.s4 1934713408
        %v1221 = vunpack.c.0.s8 %v1220
        %v1222 = vlaneseq
        %v1223 = vshrl.u32 %v1222, 7
        %v1224 = vsub.s32 %v1221, %v1223
        %v1225 = vrot.slane %v1211, %v1224
        %v1226 = vcombine.low %v1202, %v1218
        %v1227 = vcombine.high %v1202, %v1218
        %v1228 = vcombine.low %v1209, %v1225
        %v1229 = vcombine.high %v1209, %v1225
        %v1230 = vpack.c.bf16 %v1226, %v1226
        %v1231 = vpack.c.bf16 %v1227, %v1227
        %v1232 = vpack.c.bf16 %v1228, %v1228
        %v1233 = vpack.c.bf16 %v1229, %v1229
        %vm1234 = vcmask 64512
        %v1236 = vsel %vm1234, %v926, 0
        %v1239 = vsel %vm1234, %v1078, 0
        %1241 = vmatprep.subr.bf16.mxu0 0
        %1242 = vmatpush1.bf16.xpose.msra.mxu0 0
        %1243 = vmatprep.subr.bf16.mxu0 0
        %1244 = vmatpush1.bf16.xpose.msra.mxu0 0
        %1245 = vmatprep.subr.bf16.mxu0 0
        %1246 = vmatpush1.bf16.xpose.msra.mxu0 0
        %1247 = vmatprep.subr.bf16.mxu0 0
        %1248 = vmatpush1.bf16.xpose.msra.mxu0 0
        %1249 = vmatprep.subr.bf16.mxu0 0
        %1250 = vmatpush1.bf16.xpose.msra.mxu0 0
        %1251 = vmatprep.subr.bf16.mxu0 0
        %1252 = vmatpush1.bf16.xpose.msra.mxu0 0
        %1253 = vmatprep.subr.bf16.mxu0 0
        %1254 = vmatpush1.bf16.xpose.msra.mxu0 0
        %1255 = vmatprep.subr.bf16.mxu0 0
        %1256 = vmatpush1.bf16.xpose.msra.mxu0 %v1239
        %1257 = vmatprep.subr.bf16.mxu0 0
        %1258 = vmatpush2.bf16.xpose.msra.mxu0 0
        %1259 = vmatprep.subr.bf16.mxu0 0
        %1260 = vmatpush2.bf16.xpose.msra.mxu0 0
        %1261 = vmatprep.subr.bf16.mxu0 0
        %1262 = vmatpush2.bf16.xpose.msra.mxu0 0
        %1263 = vmatprep.subr.bf16.mxu0 0
        %1264 = vmatpush2.bf16.xpose.msra.mxu0 0
        %1265 = vmatprep.subr.bf16.mxu0 0
        %1266 = vmatpush2.bf16.xpose.msra.mxu0 0
        %1267 = vmatprep.subr.bf16.mxu0 0
        %1268 = vmatpush2.bf16.xpose.msra.mxu0 0
        %1269 = vmatprep.subr.bf16.mxu0 0
        %1270 = vmatpush2.bf16.xpose.msra.mxu0 0
        %1271 = vmatprep.subr.bf16.mxu0 0
        %1272 = vmatpush2.bf16.xpose.msra.mxu0 0
        %1273 = vmatprep.mubr.bf16.mxu0 0
        %1274 = vmatmul.mubr.bf16.gmra.mxu0 %v1236
        %v1275 = vpop.f32.mrf.mxu0
        %v1276 = vadd.f32 0.0, %v1275
        %v1277 = vpop.f32.mrf.mxu0
        %v1278 = vpop.f32.mrf.mxu0
        %v1279 = vpop.f32.mrf.mxu0
        %1280 = vdwg.mxu0
        %v1282 = vsel %vm1234, %v927, 0
        %v1285 = vsel %vm1234, %v1079, 0
        %1287 = vmatprep.subr.bf16.mxu0 0
        %1288 = vmatpush1.bf16.xpose.msra.mxu0 0
        %1289 = vmatprep.subr.bf16.mxu0 0
        %1290 = vmatpush1.bf16.xpose.msra.mxu0 0
        %1291 = vmatprep.subr.bf16.mxu0 0
        %1292 = vmatpush1.bf16.xpose.msra.mxu0 0
        %1293 = vmatprep.subr.bf16.mxu0 0
        %1294 = vmatpush1.bf16.xpose.msra.mxu0 0
        %1295 = vmatprep.subr.bf16.mxu0 0
        %1296 = vmatpush1.bf16.xpose.msra.mxu0 0
        %1297 = vmatprep.subr.bf16.mxu0 0
        %1298 = vmatpush1.bf16.xpose.msra.mxu0 0
        %1299 = vmatprep.subr.bf16.mxu0 0
        %1300 = vmatpush1.bf16.xpose.msra.mxu0 0
        %1301 = vmatprep.subr.bf16.mxu0 0
        %1302 = vmatpush1.bf16.xpose.msra.mxu0 %v1285
        %1303 = vmatprep.subr.bf16.mxu0 0
        %1304 = vmatpush2.bf16.xpose.msra.mxu0 0
        %1305 = vmatprep.subr.bf16.mxu0 0
        %1306 = vmatpush2.bf16.xpose.msra.mxu0 0
        %1307 = vmatprep.subr.bf16.mxu0 0
        %1308 = vmatpush2.bf16.xpose.msra.mxu0 0
        %1309 = vmatprep.subr.bf16.mxu0 0
        %1310 = vmatpush2.bf16.xpose.msra.mxu0 0
        %1311 = vmatprep.subr.bf16.mxu0 0
        %1312 = vmatpush2.bf16.xpose.msra.mxu0 0
        %1313 = vmatprep.subr.bf16.mxu0 0
        %1314 = vmatpush2.bf16.xpose.msra.mxu0 0
        %1315 = vmatprep.subr.bf16.mxu0 0
        %1316 = vmatpush2.bf16.xpose.msra.mxu0 0
        %1317 = vmatprep.subr.bf16.mxu0 0
        %1318 = vmatpush2.bf16.xpose.msra.mxu0 0
        %1319 = vmatprep.mubr.bf16.mxu0 0
        %1320 = vmatmul.mubr.bf16.gmra.mxu0 %v1282
        %v1321 = vpop.f32.mrf.mxu0
        %v1322 = vadd.f32 0.0, %v1321
        %v1323 = vpop.f32.mrf.mxu0
        %v1324 = vpop.f32.mrf.mxu0
        %v1325 = vpop.f32.mrf.mxu0
        %1326 = vdwg.mxu0
        %v1328 = vsel %vm1234, %v928, 0
        %v1331 = vsel %vm1234, %v1080, 0
        %1333 = vmatprep.subr.bf16.mxu0 0
        %1334 = vmatpush1.bf16.xpose.msra.mxu0 0
        %1335 = vmatprep.subr.bf16.mxu0 0
        %1336 = vmatpush1.bf16.xpose.msra.mxu0 0
        %1337 = vmatprep.subr.bf16.mxu0 0
        %1338 = vmatpush1.bf16.xpose.msra.mxu0 0
        %1339 = vmatprep.subr.bf16.mxu0 0
        %1340 = vmatpush1.bf16.xpose.msra.mxu0 0
        %1341 = vmatprep.subr.bf16.mxu0 0
        %1342 = vmatpush1.bf16.xpose.msra.mxu0 0
        %1343 = vmatprep.subr.bf16.mxu0 0
        %1344 = vmatpush1.bf16.xpose.msra.mxu0 0
        %1345 = vmatprep.subr.bf16.mxu0 0
        %1346 = vmatpush1.bf16.xpose.msra.mxu0 0
        %1347 = vmatprep.subr.bf16.mxu0 0
        %1348 = vmatpush1.bf16.xpose.msra.mxu0 %v1331
        %1349 = vmatprep.subr.bf16.mxu0 0
        %1350 = vmatpush2.bf16.xpose.msra.mxu0 0
        %1351 = vmatprep.subr.bf16.mxu0 0
        %1352 = vmatpush2.bf16.xpose.msra.mxu0 0
        %1353 = vmatprep.subr.bf16.mxu0 0
        %1354 = vmatpush2.bf16.xpose.msra.mxu0 0
        %1355 = vmatprep.subr.bf16.mxu0 0
        %1356 = vmatpush2.bf16.xpose.msra.mxu0 0
        %1357 = vmatprep.subr.bf16.mxu0 0
        %1358 = vmatpush2.bf16.xpose.msra.mxu0 0
        %1359 = vmatprep.subr.bf16.mxu0 0
        %1360 = vmatpush2.bf16.xpose.msra.mxu0 0
        %1361 = vmatprep.subr.bf16.mxu0 0
        %1362 = vmatpush2.bf16.xpose.msra.mxu0 0
        %1363 = vmatprep.subr.bf16.mxu0 0
        %1364 = vmatpush2.bf16.xpose.msra.mxu0 0
        %1365 = vmatprep.mubr.bf16.mxu0 0
        %1366 = vmatmul.mubr.bf16.gmra.mxu0 %v1328
        %v1367 = vpop.f32.mrf.mxu0
        %v1368 = vadd.f32 0.0, %v1367
        %v1369 = vpop.f32.mrf.mxu0
        %v1370 = vpop.f32.mrf.mxu0
        %v1371 = vpop.f32.mrf.mxu0
        %1372 = vdwg.mxu0
        %v1374 = vsel %vm1234, %v929, 0
        %v1377 = vsel %vm1234, %v1081, 0
        %1379 = vmatprep.subr.bf16.mxu0 0
        %1380 = vmatpush1.bf16.xpose.msra.mxu0 0
        %1381 = vmatprep.subr.bf16.mxu0 0
        %1382 = vmatpush1.bf16.xpose.msra.mxu0 0
        %1383 = vmatprep.subr.bf16.mxu0 0
        %1384 = vmatpush1.bf16.xpose.msra.mxu0 0
        %1385 = vmatprep.subr.bf16.mxu0 0
        %1386 = vmatpush1.bf16.xpose.msra.mxu0 0
        %1387 = vmatprep.subr.bf16.mxu0 0
        %1388 = vmatpush1.bf16.xpose.msra.mxu0 0
        %1389 = vmatprep.subr.bf16.mxu0 0
        %1390 = vmatpush1.bf16.xpose.msra.mxu0 0
        %1391 = vmatprep.subr.bf16.mxu0 0
        %1392 = vmatpush1.bf16.xpose.msra.mxu0 0
        %1393 = vmatprep.subr.bf16.mxu0 0
        %1394 = vmatpush1.bf16.xpose.msra.mxu0 %v1377
        %1395 = vmatprep.subr.bf16.mxu0 0
        %1396 = vmatpush2.bf16.xpose.msra.mxu0 0
        %1397 = vmatprep.subr.bf16.mxu0 0
        %1398 = vmatpush2.bf16.xpose.msra.mxu0 0
        %1399 = vmatprep.subr.bf16.mxu0 0
        %1400 = vmatpush2.bf16.xpose.msra.mxu0 0
        %1401 = vmatprep.subr.bf16.mxu0 0
        %1402 = vmatpush2.bf16.xpose.msra.mxu0 0
        %1403 = vmatprep.subr.bf16.mxu0 0
        %1404 = vmatpush2.bf16.xpose.msra.mxu0 0
        %1405 = vmatprep.subr.bf16.mxu0 0
        %1406 = vmatpush2.bf16.xpose.msra.mxu0 0
        %1407 = vmatprep.subr.bf16.mxu0 0
        %1408 = vmatpush2.bf16.xpose.msra.mxu0 0
        %1409 = vmatprep.subr.bf16.mxu0 0
        %1410 = vmatpush2.bf16.xpose.msra.mxu0 0
        %1411 = vmatprep.mubr.bf16.mxu0 0
        %1412 = vmatmul.mubr.bf16.gmra.mxu0 %v1374
        %v1413 = vpop.f32.mrf.mxu0
        %v1414 = vadd.f32 0.0, %v1413
        %v1415 = vpop.f32.mrf.mxu0
        %v1416 = vpop.f32.mrf.mxu0
        %v1417 = vpop.f32.mrf.mxu0
        %1418 = vdwg.mxu0
        %v1419 = vmul.f32 %v1276, 0.35355338
        %v1420 = vmul.f32 %v1322, 0.35355338
        %v1421 = vmul.f32 %v1368, 0.35355338
        %v1422 = vmul.f32 %v1414, 0.35355338
        %v1423 = vsel %vm1234, %v1419, -inf
        %1424 = vmax.xlane.f32.xlu0 %v1423
        %v1425 = vpop.xlane.xlu0 %1424
        %v1426 = vsel %vm1234, %v1420, -inf
        %1427 = vmax.xlane.f32.xlu0 %v1426
        %v1428 = vpop.xlane.xlu0 %1427
        %v1429 = vsel %vm1234, %v1421, -inf
        %1430 = vmax.xlane.f32.xlu0 %v1429
        %v1431 = vpop.xlane.xlu0 %1430
        %v1432 = vsel %vm1234, %v1422, -inf
        %1433 = vmax.xlane.f32.xlu0 %v1432
        %v1434 = vpop.xlane.xlu0 %1433
        %v1435 = vsub.f32 %v1419, %v1425
        %v1436 = vsub.f32 %v1420, %v1428
        %v1437 = vsub.f32 %v1421, %v1431
        %v1438 = vsub.f32 %v1422, %v1434
        %v1439 = vmul.f32 %v1435, 1.442695
        %v1440 = vpow.pop %v1439
        %v1441 = vmul.f32 %v1436, 1.442695
        %v1442 = vpow.pop %v1441
        %v1443 = vmul.f32 %v1437, 1.442695
        %v1444 = vpow.pop %v1443
        %v1445 = vmul.f32 %v1438, 1.442695
        %v1446 = vpow.pop %v1445
        %v1447 = vsel %vm1234, %v1440, 0.0
        %1448 = vadd.xlane.f32.xlu0 %v1447
        %v1449 = vpop.xlane.xlu0 %1448
        %v1450 = vsel %vm1234, %v1442, 0.0
        %1451 = vadd.xlane.f32.xlu0 %v1450
        %v1452 = vpop.xlane.xlu0 %1451
        %v1453 = vsel %vm1234, %v1444, 0.0
        %1454 = vadd.xlane.f32.xlu0 %v1453
        %v1455 = vpop.xlane.xlu0 %1454
        %v1456 = vsel %vm1234, %v1446, 0.0
        %1457 = vadd.xlane.f32.xlu0 %v1456
        %v1458 = vpop.xlane.xlu0 %1457
        %v1459 = vrcp.pop %v1449
        %v1460 = vrcp.pop %v1452
        %v1461 = vrcp.pop %v1455
        %v1462 = vrcp.pop %v1458
        %v1463 = vmul.f32 %v1440, %v1459
        %v1464 = vmul.f32 %v1442, %v1460
        %v1465 = vmul.f32 %v1444, %v1461
        %v1466 = vmul.f32 %v1446, %v1462
        %v1467 = vpack.c.bf16 %v1463, %v1463
        %v1468 = vpack.c.bf16 %v1464, %v1464
        %v1469 = vpack.c.bf16 %v1465, %v1465
        %v1470 = vpack.c.bf16 %v1466, %v1466
        %v1472 = vsel %vm1234, %v1467, 0
        %vm1474 = vcmask 1043456
        %v1476 = vsel %vm1474, %v1230, 0
        %1478 = vmatprep.subr.bf16.mxu0 0
        %1479 = vmatpush1.bf16.msra.mxu0 0
        %1480 = vmatprep.subr.bf16.mxu0 0
        %1481 = vmatpush1.bf16.msra.mxu0 0
        %1482 = vmatprep.subr.bf16.mxu0 0
        %1483 = vmatpush1.bf16.msra.mxu0 0
        %1484 = vmatprep.subr.bf16.mxu0 0
        %1485 = vmatpush1.bf16.msra.mxu0 0
        %1486 = vmatprep.subr.bf16.mxu0 0
        %1487 = vmatpush1.bf16.msra.mxu0 0
        %1488 = vmatprep.subr.bf16.mxu0 0
        %1489 = vmatpush1.bf16.msra.mxu0 0
        %1490 = vmatprep.subr.bf16.mxu0 0
        %1491 = vmatpush1.bf16.msra.mxu0 0
        %1492 = vmatprep.subr.bf16.mxu0 0
        %1493 = vmatpush1.bf16.msra.mxu0 %v1476
        %1494 = vmatprep.subr.bf16.mxu0 0
        %1495 = vmatpush2.bf16.msra.mxu0 0
        %1496 = vmatprep.subr.bf16.mxu0 0
        %1497 = vmatpush2.bf16.msra.mxu0 0
        %1498 = vmatprep.subr.bf16.mxu0 0
        %1499 = vmatpush2.bf16.msra.mxu0 0
        %1500 = vmatprep.subr.bf16.mxu0 0
        %1501 = vmatpush2.bf16.msra.mxu0 0
        %1502 = vmatprep.subr.bf16.mxu0 0
        %1503 = vmatpush2.bf16.msra.mxu0 0
        %1504 = vmatprep.subr.bf16.mxu0 0
        %1505 = vmatpush2.bf16.msra.mxu0 0
        %1506 = vmatprep.subr.bf16.mxu0 0
        %1507 = vmatpush2.bf16.msra.mxu0 0
        %1508 = vmatprep.subr.bf16.mxu0 0
        %1509 = vmatpush2.bf16.msra.mxu0 0
        %1510 = vmatprep.mubr.bf16.mxu0 0
        %1511 = vmatmul.mubr.bf16.gmra.mxu0 %v1472
        %v1512 = vpop.f32.mrf.mxu0
        %v1513 = vadd.f32 0.0, %v1512
        %v1514 = vpop.f32.mrf.mxu0
        %v1515 = vpop.f32.mrf.mxu0
        %v1516 = vpop.f32.mrf.mxu0
        %1517 = vdwg.mxu0
        %v1519 = vsel %vm1234, %v1468, 0
        %v1522 = vsel %vm1474, %v1231, 0
        %1524 = vmatprep.subr.bf16.mxu0 0
        %1525 = vmatpush1.bf16.msra.mxu0 0
        %1526 = vmatprep.subr.bf16.mxu0 0
        %1527 = vmatpush1.bf16.msra.mxu0 0
        %1528 = vmatprep.subr.bf16.mxu0 0
        %1529 = vmatpush1.bf16.msra.mxu0 0
        %1530 = vmatprep.subr.bf16.mxu0 0
        %1531 = vmatpush1.bf16.msra.mxu0 0
        %1532 = vmatprep.subr.bf16.mxu0 0
        %1533 = vmatpush1.bf16.msra.mxu0 0
        %1534 = vmatprep.subr.bf16.mxu0 0
        %1535 = vmatpush1.bf16.msra.mxu0 0
        %1536 = vmatprep.subr.bf16.mxu0 0
        %1537 = vmatpush1.bf16.msra.mxu0 0
        %1538 = vmatprep.subr.bf16.mxu0 0
        %1539 = vmatpush1.bf16.msra.mxu0 %v1522
        %1540 = vmatprep.subr.bf16.mxu0 0
        %1541 = vmatpush2.bf16.msra.mxu0 0
        %1542 = vmatprep.subr.bf16.mxu0 0
        %1543 = vmatpush2.bf16.msra.mxu0 0
        %1544 = vmatprep.subr.bf16.mxu0 0
        %1545 = vmatpush2.bf16.msra.mxu0 0
        %1546 = vmatprep.subr.bf16.mxu0 0
        %1547 = vmatpush2.bf16.msra.mxu0 0
        %1548 = vmatprep.subr.bf16.mxu0 0
        %1549 = vmatpush2.bf16.msra.mxu0 0
        %1550 = vmatprep.subr.bf16.mxu0 0
        %1551 = vmatpush2.bf16.msra.mxu0 0
        %1552 = vmatprep.subr.bf16.mxu0 0
        %1553 = vmatpush2.bf16.msra.mxu0 0
        %1554 = vmatprep.subr.bf16.mxu0 0
        %1555 = vmatpush2.bf16.msra.mxu0 0
        %1556 = vmatprep.mubr.bf16.mxu0 0
        %1557 = vmatmul.mubr.bf16.gmra.mxu0 %v1519
        %v1558 = vpop.f32.mrf.mxu0
        %v1559 = vadd.f32 0.0, %v1558
        %v1560 = vpop.f32.mrf.mxu0
        %v1561 = vpop.f32.mrf.mxu0
        %v1562 = vpop.f32.mrf.mxu0
        %1563 = vdwg.mxu0
        %v1565 = vsel %vm1234, %v1469, 0
        %v1568 = vsel %vm1474, %v1232, 0
        %1570 = vmatprep.subr.bf16.mxu0 0
        %1571 = vmatpush1.bf16.msra.mxu0 0
        %1572 = vmatprep.subr.bf16.mxu0 0
        %1573 = vmatpush1.bf16.msra.mxu0 0
        %1574 = vmatprep.subr.bf16.mxu0 0
        %1575 = vmatpush1.bf16.msra.mxu0 0
        %1576 = vmatprep.subr.bf16.mxu0 0
        %1577 = vmatpush1.bf16.msra.mxu0 0
        %1578 = vmatprep.subr.bf16.mxu0 0
        %1579 = vmatpush1.bf16.msra.mxu0 0
        %1580 = vmatprep.subr.bf16.mxu0 0
        %1581 = vmatpush1.bf16.msra.mxu0 0
        %1582 = vmatprep.subr.bf16.mxu0 0
        %1583 = vmatpush1.bf16.msra.mxu0 0
        %1584 = vmatprep.subr.bf16.mxu0 0
        %1585 = vmatpush1.bf16.msra.mxu0 %v1568
        %1586 = vmatprep.subr.bf16.mxu0 0
        %1587 = vmatpush2.bf16.msra.mxu0 0
        %1588 = vmatprep.subr.bf16.mxu0 0
        %1589 = vmatpush2.bf16.msra.mxu0 0
        %1590 = vmatprep.subr.bf16.mxu0 0
        %1591 = vmatpush2.bf16.msra.mxu0 0
        %1592 = vmatprep.subr.bf16.mxu0 0
        %1593 = vmatpush2.bf16.msra.mxu0 0
        %1594 = vmatprep.subr.bf16.mxu0 0
        %1595 = vmatpush2.bf16.msra.mxu0 0
        %1596 = vmatprep.subr.bf16.mxu0 0
        %1597 = vmatpush2.bf16.msra.mxu0 0
        %1598 = vmatprep.subr.bf16.mxu0 0
        %1599 = vmatpush2.bf16.msra.mxu0 0
        %1600 = vmatprep.subr.bf16.mxu0 0
        %1601 = vmatpush2.bf16.msra.mxu0 0
        %1602 = vmatprep.mubr.bf16.mxu0 0
        %1603 = vmatmul.mubr.bf16.gmra.mxu0 %v1565
        %v1604 = vpop.f32.mrf.mxu0
        %v1605 = vadd.f32 0.0, %v1604
        %v1606 = vpop.f32.mrf.mxu0
        %v1607 = vpop.f32.mrf.mxu0
        %v1608 = vpop.f32.mrf.mxu0
        %1609 = vdwg.mxu0
        %v1611 = vsel %vm1234, %v1470, 0
        %v1614 = vsel %vm1474, %v1233, 0
        %1616 = vmatprep.subr.bf16.mxu0 0
        %1617 = vmatpush1.bf16.msra.mxu0 0
        %1618 = vmatprep.subr.bf16.mxu0 0
        %1619 = vmatpush1.bf16.msra.mxu0 0
        %1620 = vmatprep.subr.bf16.mxu0 0
        %1621 = vmatpush1.bf16.msra.mxu0 0
        %1622 = vmatprep.subr.bf16.mxu0 0
        %1623 = vmatpush1.bf16.msra.mxu0 0
        %1624 = vmatprep.subr.bf16.mxu0 0
        %1625 = vmatpush1.bf16.msra.mxu0 0
        %1626 = vmatprep.subr.bf16.mxu0 0
        %1627 = vmatpush1.bf16.msra.mxu0 0
        %1628 = vmatprep.subr.bf16.mxu0 0
        %1629 = vmatpush1.bf16.msra.mxu0 0
        %1630 = vmatprep.subr.bf16.mxu0 0
        %1631 = vmatpush1.bf16.msra.mxu0 %v1614
        %1632 = vmatprep.subr.bf16.mxu0 0
        %1633 = vmatpush2.bf16.msra.mxu0 0
        %1634 = vmatprep.subr.bf16.mxu0 0
        %1635 = vmatpush2.bf16.msra.mxu0 0
        %1636 = vmatprep.subr.bf16.mxu0 0
        %1637 = vmatpush2.bf16.msra.mxu0 0
        %1638 = vmatprep.subr.bf16.mxu0 0
        %1639 = vmatpush2.bf16.msra.mxu0 0
        %1640 = vmatprep.subr.bf16.mxu0 0
        %1641 = vmatpush2.bf16.msra.mxu0 0
        %1642 = vmatprep.subr.bf16.mxu0 0
        %1643 = vmatpush2.bf16.msra.mxu0 0
        %1644 = vmatprep.subr.bf16.mxu0 0
        %1645 = vmatpush2.bf16.msra.mxu0 0
        %1646 = vmatprep.subr.bf16.mxu0 0
        %1647 = vmatpush2.bf16.msra.mxu0 0
        %1648 = vmatprep.mubr.bf16.mxu0 0
        %1649 = vmatmul.mubr.bf16.gmra.mxu0 %v1611
        %v1650 = vpop.f32.mrf.mxu0
        %v1651 = vadd.f32 0.0, %v1650
        %v1652 = vpop.f32.mrf.mxu0
        %v1653 = vpop.f32.mrf.mxu0
        %v1654 = vpop.f32.mrf.mxu0
        %1655 = vdwg.mxu0
        %v1656 = vcombine.low %v1513, %v1605
        %v1657 = vcombine.high %v1513, %v1605
        %v1659 = vunpack.c.l.s4 1983009808
        %v1660 = vunpack.c.0.s8 %v1659
        %v1661 = vlaneseq
        %v1662 = vshrl.u32 %v1661, 7
        %v1663 = vsub.s32 %v1660, %v1662
        %v1664 = vrot.slane %v1656, %v1663
        %v1666 = vunpack.c.l.s4 1983009808
        %v1667 = vunpack.c.0.s8 %v1666
        %v1668 = vlaneseq
        %v1669 = vshrl.u32 %v1668, 7
        %v1670 = vsub.s32 %v1667, %v1669
        %v1671 = vrot.slane %v1657, %v1670
        %v1672 = vcombine.low %v1559, %v1651
        %v1673 = vcombine.high %v1559, %v1651
        %v1675 = vunpack.c.l.s4 1983009808
        %v1676 = vunpack.c.0.s8 %v1675
        %v1677 = vlaneseq
        %v1678 = vshrl.u32 %v1677, 7
        %v1679 = vsub.s32 %v1676, %v1678
        %v1680 = vrot.slane %v1672, %v1679
        %v1682 = vunpack.c.l.s4 1983009808
        %v1683 = vunpack.c.0.s8 %v1682
        %v1684 = vlaneseq
        %v1685 = vshrl.u32 %v1684, 7
        %v1686 = vsub.s32 %v1683, %v1685
        %v1687 = vrot.slane %v1673, %v1686
        %v1688 = vcombine.low %v1664, %v1680
        %v1689 = vcombine.high %v1664, %v1680
        %v1691 = vunpack.c.l.s4 1934713408
        %v1692 = vunpack.c.0.s8 %v1691
        %v1693 = vlaneseq
        %v1694 = vshrl.u32 %v1693, 7
        %v1695 = vsub.s32 %v1692, %v1694
        %v1696 = vrot.slane %v1688, %v1695
        %v1698 = vunpack.c.l.s4 1934713408
        %v1699 = vunpack.c.0.s8 %v1698
        %v1700 = vlaneseq
        %v1701 = vshrl.u32 %v1700, 7
        %v1702 = vsub.s32 %v1699, %v1701
        %v1703 = vrot.slane %v1689, %v1702
        %v1704 = vcombine.low %v1671, %v1687
        %v1705 = vcombine.high %v1671, %v1687
        %v1707 = vunpack.c.l.s4 1934713408
        %v1708 = vunpack.c.0.s8 %v1707
        %v1709 = vlaneseq
        %v1710 = vshrl.u32 %v1709, 7
        %v1711 = vsub.s32 %v1708, %v1710
        %v1712 = vrot.slane %v1704, %v1711
        %v1714 = vunpack.c.l.s4 1934713408
        %v1715 = vunpack.c.0.s8 %v1714
        %v1716 = vlaneseq
        %v1717 = vshrl.u32 %v1716, 7
        %v1718 = vsub.s32 %v1715, %v1717
        %v1719 = vrot.slane %v1705, %v1718
        %v1720 = vcombine.high %v1696, 0.0
        %v1721 = vcombine.high %v1703, 0.0
        %v1722 = vcombine.high %v1712, 0.0
        %v1723 = vcombine.high %v1719, 0.0
        %v1724 = vcombine.low %v1696, %v1703
        %v1726 = vunpack.c.l.s4 1983009808
        %v1727 = vunpack.c.0.s8 %v1726
        %v1728 = vlaneseq
        %v1729 = vshrl.u32 %v1728, 7
        %v1730 = vsub.s32 %v1727, %v1729
        %v1731 = vrot.slane %v1724, %v1730
        %v1732 = vcombine.low %v1720, %v1721
        %v1734 = vunpack.c.l.s4 1983009808
        %v1735 = vunpack.c.0.s8 %v1734
        %v1736 = vlaneseq
        %v1737 = vshrl.u32 %v1736, 7
        %v1738 = vsub.s32 %v1735, %v1737
        %v1739 = vrot.slane %v1732, %v1738
        %v1740 = vcombine.low %v1712, %v1719
        %v1742 = vunpack.c.l.s4 1983009808
        %v1743 = vunpack.c.0.s8 %v1742
        %v1744 = vlaneseq
        %v1745 = vshrl.u32 %v1744, 7
        %v1746 = vsub.s32 %v1743, %v1745
        %v1747 = vrot.slane %v1740, %v1746
        %v1748 = vcombine.low %v1722, %v1723
        %v1750 = vunpack.c.l.s4 1983009808
        %v1751 = vunpack.c.0.s8 %v1750
        %v1752 = vlaneseq
        %v1753 = vshrl.u32 %v1752, 7
        %v1754 = vsub.s32 %v1751, %v1753
        %v1755 = vrot.slane %v1748, %v1754
        %v1756 = vcombine.low %v1731, %v1739
        %v1757 = vcombine.high %v1731, %v1739
        %v1759 = vunpack.c.l.s4 1934713408
        %v1760 = vunpack.c.0.s8 %v1759
        %v1761 = vlaneseq
        %v1762 = vshrl.u32 %v1761, 7
        %v1763 = vsub.s32 %v1760, %v1762
        %v1764 = vrot.slane %v1756, %v1763
        %v1766 = vunpack.c.l.s4 1934713408
        %v1767 = vunpack.c.0.s8 %v1766
        %v1768 = vlaneseq
        %v1769 = vshrl.u32 %v1768, 7
        %v1770 = vsub.s32 %v1767, %v1769
        %v1771 = vrot.slane %v1757, %v1770
        %v1772 = vcombine.low %v1747, %v1755
        %v1773 = vcombine.high %v1747, %v1755
        %v1775 = vunpack.c.l.s4 1934713408
        %v1776 = vunpack.c.0.s8 %v1775
        %v1777 = vlaneseq
        %v1778 = vshrl.u32 %v1777, 7
        %v1779 = vsub.s32 %v1776, %v1778
        %v1780 = vrot.slane %v1772, %v1779
        %v1782 = vunpack.c.l.s4 1934713408
        %v1783 = vunpack.c.0.s8 %v1782
        %v1784 = vlaneseq
        %v1785 = vshrl.u32 %v1784, 7
        %v1786 = vsub.s32 %v1783, %v1785
        %v1787 = vrot.slane %v1773, %v1786
        %v1788 = vcombine.low %v1764, %v1780
        %v1789 = vcombine.high %v1764, %v1780
        %v1790 = vcombine.low %v1771, %v1787
        %v1791 = vcombine.high %v1771, %v1787
        %1793 = vrot.lane.b32.xlu0 %v1789, 8
        %v1794 = vpop.permute.xlu0 %1793
        %1797 = vrot.lane.b32.xlu0 %v1790, 16
        %v1798 = vpop.permute.xlu0 %1797
        %1801 = vrot.lane.b32.xlu0 %v1791, 24
        %v1802 = vpop.permute.xlu0 %1801
        %v1804 = vsel %vm1234, %v1788, %v1794
        %vm1805 = vcmask 130048
        %v1806 = vsel %vm1805, %v1804, %v1798
        %vm1807 = vcmask 195584
        %v1808 = vsel %vm1807, %v1806, %v1802
        %v1809 = vpack.c.bf16 %v1808, %v1808
        %v1810 = vld [vmem:[%s668] sm:$0xf]
        %v1811 = vld [vmem:[%s668 + $0x4] sm:$0xf]
        %v1812 = vld [vmem:[%s668 + $0x8] sm:$0xf]
        %v1813 = vld [vmem:[%s668 + $0xc] sm:$0xf]
        %v1814 = vld [vmem:[%s671] sm:$0x1]
        %v1816 = vlaneseq
        %v1817 = vshrl.u32 %v1816, 7
        %v1818 = vsub.s32 0, %v1817
        %v1819 = vrot.slane %v1814, %v1818
        %v1825 = vunpack.c.l.b16 %v1810
        %v1826 = vunpack.c.l.b16 %v1811
        %v1827 = vunpack.c.l.b16 %v1812
        %v1828 = vunpack.c.l.b16 %v1813
        %v1829 = vpack.c.b16 %v1826, %v1825
        %v1830 = vpack.c.b16 %v1828, %v1827
        %v1834 = vsel %vm736, %v1809, 0
        %1836 = vmatprep.subr.bf16.mxu0 0
        %1837 = vmatpush1.bf16.msra.mxu0 0
        %1838 = vmatprep.subr.bf16.mxu0 0
        %1839 = vmatpush1.bf16.msra.mxu0 0
        %1840 = vmatprep.subr.bf16.mxu0 0
        %1841 = vmatpush1.bf16.msra.mxu0 0
        %1842 = vmatprep.subr.bf16.mxu0 0
        %1843 = vmatpush1.bf16.msra.mxu0 0
        %1844 = vmatprep.subr.bf16.mxu0 0
        %1845 = vmatpush1.bf16.msra.mxu0 0
        %1846 = vmatprep.subr.bf16.mxu0 0
        %1847 = vmatpush1.bf16.msra.mxu0 0
        %1848 = vmatprep.subr.bf16.mxu0 0
        %1849 = vmatpush1.bf16.msra.mxu0 %v1830
        %1850 = vmatprep.subr.bf16.mxu0 0
        %1851 = vmatpush1.bf16.msra.mxu0 %v1829
        %1852 = vmatprep.subr.bf16.mxu0 0
        %1853 = vmatpush2.bf16.msra.mxu0 0
        %1854 = vmatprep.subr.bf16.mxu0 0
        %1855 = vmatpush2.bf16.msra.mxu0 0
        %1856 = vmatprep.subr.bf16.mxu0 0
        %1857 = vmatpush2.bf16.msra.mxu0 0
        %1858 = vmatprep.subr.bf16.mxu0 0
        %1859 = vmatpush2.bf16.msra.mxu0 0
        %1860 = vmatprep.subr.bf16.mxu0 0
        %1861 = vmatpush2.bf16.msra.mxu0 0
        %1862 = vmatprep.subr.bf16.mxu0 0
        %1863 = vmatpush2.bf16.msra.mxu0 0
        %1864 = vmatprep.subr.bf16.mxu0 0
        %1865 = vmatpush2.bf16.msra.mxu0 0
        %1866 = vmatprep.subr.bf16.mxu0 0
        %1867 = vmatpush2.bf16.msra.mxu0 0
        %1868 = vmatprep.mubr.bf16.mxu0 0
        %1869 = vmatmul.mubr.bf16.gmra.mxu0 %v1834
        %v1870 = vpop.f32.mrf.mxu0
        %v1871 = vadd.f32 %v1819, %v1870
        %v1872 = vpop.f32.mrf.mxu0
        %v1873 = vpop.f32.mrf.mxu0
        %v1874 = vpop.f32.mrf.mxu0
        %1875 = vdwg.mxu0
        %v1876 = vadd.f32 %v711, %v1871
        %v1877 = vld [vmem:[%s674] sm:$0x1]
        %v1878 = vld [vmem:[%s677] sm:$0x1]
        %v1879 = vsel %vm736, %v1876, 0.0
        %1880 = vadd.xlane.f32.xlu0 %v1879
        %v1881 = vpop.xlane.xlu0 %1880
        %v1882 = vrcp.pop 32.0
        %v1883 = vmul.f32 %v1881, %v1882
        %v1884 = vsub.f32 %v1876, %v1883
        %v1885 = vmul.f32 %v1884, %v1884
        %v1886 = vsel %vm736, %v1885, 0.0
        %1887 = vadd.xlane.f32.xlu0 %v1886
        %v1888 = vpop.xlane.xlu0 %1887
        %v1889 = vmul.f32 %v1888, %v1882
        %v1890 = vadd.f32 %v1889, 1e-05
        %v1891 = vrsqrt.pop %v1890
        %v1892 = vmul.f32 %v1884, %v1891
        %v1894 = vlaneseq
        %v1895 = vshrl.u32 %v1894, 7
        %v1896 = vsub.s32 0, %v1895
        %v1897 = vrot.slane %v1877, %v1896
        %v1899 = vmul.f32 %v1892, %v1897
        %v1901 = vlaneseq
        %v1902 = vshrl.u32 %v1901, 7
        %v1903 = vsub.s32 0, %v1902
        %v1904 = vrot.slane %v1878, %v1903
        %v1906 = vadd.f32 %v1899, %v1904
        %v1907 = vpack.c.bf16 %v1906, %v1906
        %v1908 = vld [vmem:[%s682] sm:$0xf]
        %v1909 = vld [vmem:[%s682 + $0x4] sm:$0xf]
        %v1910 = vld [vmem:[%s682 + $0x8] sm:$0xf]
        %v1911 = vld [vmem:[%s682 + $0xc] sm:$0xf]
        %v1912 = vld [vmem:[%s685] sm:$0x1]
        %v1914 = vlaneseq
        %v1915 = vshrl.u32 %v1914, 7
        %v1916 = vsub.s32 0, %v1915
        %v1917 = vrot.slane %v1912, %v1916
        %v1923 = vunpack.c.l.b16 %v1908
        %v1924 = vunpack.c.l.b16 %v1909
        %v1925 = vunpack.c.l.b16 %v1910
        %v1926 = vunpack.c.l.b16 %v1911
        %v1927 = vpack.c.b16 %v1924, %v1923
        %v1928 = vpack.c.b16 %v1926, %v1925
        %v1932 = vsel %vm736, %v1907, 0
        %1934 = vmatprep.subr.bf16.mxu0 0
        %1935 = vmatpush1.bf16.msra.mxu0 0
        %1936 = vmatprep.subr.bf16.mxu0 0
        %1937 = vmatpush1.bf16.msra.mxu0 0
        %1938 = vmatprep.subr.bf16.mxu0 0
        %1939 = vmatpush1.bf16.msra.mxu0 0
        %1940 = vmatprep.subr.bf16.mxu0 0
        %1941 = vmatpush1.bf16.msra.mxu0 0
        %1942 = vmatprep.subr.bf16.mxu0 0
        %1943 = vmatpush1.bf16.msra.mxu0 0
        %1944 = vmatprep.subr.bf16.mxu0 0
        %1945 = vmatpush1.bf16.msra.mxu0 0
        %1946 = vmatprep.subr.bf16.mxu0 0
        %1947 = vmatpush1.bf16.msra.mxu0 %v1928
        %1948 = vmatprep.subr.bf16.mxu0 0
        %1949 = vmatpush1.bf16.msra.mxu0 %v1927
        %1950 = vmatprep.subr.bf16.mxu0 0
        %1951 = vmatpush2.bf16.msra.mxu0 0
        %1952 = vmatprep.subr.bf16.mxu0 0
        %1953 = vmatpush2.bf16.msra.mxu0 0
        %1954 = vmatprep.subr.bf16.mxu0 0
        %1955 = vmatpush2.bf16.msra.mxu0 0
        %1956 = vmatprep.subr.bf16.mxu0 0
        %1957 = vmatpush2.bf16.msra.mxu0 0
        %1958 = vmatprep.subr.bf16.mxu0 0
        %1959 = vmatpush2.bf16.msra.mxu0 0
        %1960 = vmatprep.subr.bf16.mxu0 0
        %1961 = vmatpush2.bf16.msra.mxu0 0
        %1962 = vmatprep.subr.bf16.mxu0 0
        %1963 = vmatpush2.bf16.msra.mxu0 0
        %1964 = vmatprep.subr.bf16.mxu0 0
        %1965 = vmatpush2.bf16.msra.mxu0 0
        %1966 = vmatprep.mubr.bf16.mxu0 0
        %1967 = vmatmul.mubr.bf16.gmra.mxu0 %v1932
        %v1968 = vpop.f32.mrf.mxu0
        %v1969 = vadd.f32 %v1917, %v1968
        %v1970 = vpop.f32.mrf.mxu0
        %v1971 = vpop.f32.mrf.mxu0
        %v1972 = vpop.f32.mrf.mxu0
        %1973 = vdwg.mxu0
        %v1974 = vmax.f32 %v1969, 0.0
        %v1975 = vpack.c.bf16 %v1974, %v1974
        %v1976 = vld [vmem:[%s690] sm:$0xf]
        %v1977 = vld [vmem:[%s690 + $0x4] sm:$0xf]
        %v1978 = vld [vmem:[%s690 + $0x8] sm:$0xf]
        %v1979 = vld [vmem:[%s690 + $0xc] sm:$0xf]
        %v1980 = vld [vmem:[%s690 + $0x10] sm:$0xf]
        %v1981 = vld [vmem:[%s690 + $0x14] sm:$0xf]
        %v1982 = vld [vmem:[%s690 + $0x18] sm:$0xf]
        %v1983 = vld [vmem:[%s690 + $0x1c] sm:$0xf]
        %v1984 = vld [vmem:[%s693] sm:$0x1]
        %v1986 = vlaneseq
        %v1987 = vshrl.u32 %v1986, 7
        %v1988 = vsub.s32 0, %v1987
        %v1989 = vrot.slane %v1984, %v1988
        %v1999 = vunpack.c.l.b16 %v1976
        %v2000 = vunpack.c.l.b16 %v1977
        %v2001 = vunpack.c.l.b16 %v1978
        %v2002 = vunpack.c.l.b16 %v1979
        %v2003 = vunpack.c.l.b16 %v1980
        %v2004 = vunpack.c.l.b16 %v1981
        %v2005 = vunpack.c.l.b16 %v1982
        %v2006 = vunpack.c.l.b16 %v1983
        %v2007 = vpack.c.b16 %v2000, %v1999
        %v2008 = vpack.c.b16 %v2002, %v2001
        %v2009 = vpack.c.b16 %v2004, %v2003
        %v2010 = vpack.c.b16 %v2006, %v2005
        %vm2015 = vcmask 523264
        %v2017 = vsel %vm2015, %v1975, 0
        %2019 = vmatprep.subr.bf16.mxu0 0
        %2020 = vmatpush1.bf16.msra.mxu0 0
        %2021 = vmatprep.subr.bf16.mxu0 0
        %2022 = vmatpush1.bf16.msra.mxu0 0
        %2023 = vmatprep.subr.bf16.mxu0 0
        %2024 = vmatpush1.bf16.msra.mxu0 0
        %2025 = vmatprep.subr.bf16.mxu0 0
        %2026 = vmatpush1.bf16.msra.mxu0 0
        %2027 = vmatprep.subr.bf16.mxu0 0
        %2028 = vmatpush1.bf16.msra.mxu0 %v2010
        %2029 = vmatprep.subr.bf16.mxu0 0
        %2030 = vmatpush1.bf16.msra.mxu0 %v2009
        %2031 = vmatprep.subr.bf16.mxu0 0
        %2032 = vmatpush1.bf16.msra.mxu0 %v2008
        %2033 = vmatprep.subr.bf16.mxu0 0
        %2034 = vmatpush1.bf16.msra.mxu0 %v2007
        %2035 = vmatprep.subr.bf16.mxu0 0
        %2036 = vmatpush2.bf16.msra.mxu0 0
        %2037 = vmatprep.subr.bf16.mxu0 0
        %2038 = vmatpush2.bf16.msra.mxu0 0
        %2039 = vmatprep.subr.bf16.mxu0 0
        %2040 = vmatpush2.bf16.msra.mxu0 0
        %2041 = vmatprep.subr.bf16.mxu0 0
        %2042 = vmatpush2.bf16.msra.mxu0 0
        %2043 = vmatprep.subr.bf16.mxu0 0
        %2044 = vmatpush2.bf16.msra.mxu0 0
        %2045 = vmatprep.subr.bf16.mxu0 0
        %2046 = vmatpush2.bf16.msra.mxu0 0
        %2047 = vmatprep.subr.bf16.mxu0 0
        %2048 = vmatpush2.bf16.msra.mxu0 0
        %2049 = vmatprep.subr.bf16.mxu0 0
        %2050 = vmatpush2.bf16.msra.mxu0 0
        %2051 = vmatprep.mubr.bf16.mxu0 0
        %2052 = vmatmul.mubr.bf16.gmra.mxu0 %v2017
        %v2053 = vpop.f32.mrf.mxu0
        %v2054 = vadd.f32 %v1989, %v2053
        %v2055 = vpop.f32.mrf.mxu0
        %v2056 = vpop.f32.mrf.mxu0
        %v2057 = vpop.f32.mrf.mxu0
        %2058 = vdwg.mxu0
        %v2059 = vadd.f32 %v1906, %v2054
        %v2060 = vld [vmem:[%s696] sm:$0x1]
        %v2061 = vld [vmem:[%s699] sm:$0x1]
        %v2062 = vsel %vm736, %v2059, 0.0
        %2063 = vadd.xlane.f32.xlu0 %v2062
        %v2064 = vpop.xlane.xlu0 %2063
        %v2065 = vmul.f32 %v2064, %v1882
        %v2066 = vsub.f32 %v2059, %v2065
        %v2067 = vmul.f32 %v2066, %v2066
        %v2068 = vsel %vm736, %v2067, 0.0
        %2069 = vadd.xlane.f32.xlu0 %v2068
        %v2070 = vpop.xlane.xlu0 %2069
        %v2071 = vmul.f32 %v2070, %v1882
        %v2072 = vadd.f32 %v2071, 1e-05
        %v2073 = vrsqrt.pop %v2072
        %v2074 = vmul.f32 %v2066, %v2073
        %v2076 = vlaneseq
        %v2077 = vshrl.u32 %v2076, 7
        %v2078 = vsub.s32 0, %v2077
        %v2079 = vrot.slane %v2060, %v2078
        %v2081 = vmul.f32 %v2074, %v2079
        %v2083 = vlaneseq
        %v2084 = vshrl.u32 %v2083, 7
        %v2085 = vsub.s32 0, %v2084
        %v2086 = vrot.slane %v2061, %v2085
        %v2088 = vadd.f32 %v2081, %v2086
        %2089 = vst.msk [vmem:[#allocation2] sm:$0xff] %vm736, %v2088
        %p2090 = scmp.eq.s32.totalorder %s37, 1
        // Predicated region
        $region89: #{tpu_custom_call.1} parent=75 // pred_check
          %p2091 = pneg %p2090
        $region90: #{tpu_custom_call.1} parent=75 // pred_check_branch
          %2093 = sbr.rel (%p2091) target = $region92
        $region91: #{tpu_custom_call.1} parent=75 // pred_region
          %2094 = vst.msk [vmem:[%s655] sm:$0xff] %vm736, %v2088
        $region92: #{tpu_custom_call.1} parent=75 // pred_fallthru
          _
        %s2095 = sand.u32 %s411, 1
        %s2096 = scalar_lea.sflag [#allocation5], %s2095
        %s2097 = sand.u32 %s411, 1
        %s2098 = smul.addr %s2097, 8
        %s2099 = scalar_lea.vmem [#allocation8], %s2098
        // Predicated region
        $region93: #{tpu_custom_call.1} parent=75 // pred_check
          %p2100 = pneg %p421
        $region94: #{tpu_custom_call.1} parent=75 // pred_check_branch
          %2102 = sbr.rel (%p2100) target = $region96
        $region95: #{tpu_custom_call.1} parent=75 // pred_region
          %s2104 = ssub.s32 128, 128
          %2105 = vsyncadd %s2096, %s2104
          %s2106 = smul.addr %s36, 128
          %s2107 = scalar_lea.hbm %s14, %s2106
          %s2109 = sshll.u32 %s2099, 4
          %s2110 = int_to_ptr.vmem [resolvable:$true] %s2109
          %2112 = dma.vmem_to_hbm [thread:$0]  %s2110, 128, %s2107, %s2096
        $region96: #{tpu_custom_call.1} parent=75 // pred_fallthru
          _
      $region76: #{tpu_custom_call.1} parent=5 // pred_fallthru
        _
      %p2113 = scmp.le.s32.totalorder 2, %s27
      // Predicated region
      $region97: #{tpu_custom_call.1} parent=5 // pred_check
        %p2114 = pneg %p2113
      $region98: #{tpu_custom_call.1} parent=5 // pred_check_branch
        %2116 = sbr.rel (%p2114) target = $region100
      $region99: #{tpu_custom_call.1} parent=5 // pred_region
        %s2117 = ssub.s32 %s27, 2
        // Predicated region
        $region101: #{tpu_custom_call.1} parent=99 // pred_check
          %p2118 = pneg %p427
        $region102: #{tpu_custom_call.1} parent=99 // pred_check_branch
          %2120 = sbr.rel (%p2118) target = $region104
        $region103: #{tpu_custom_call.1} parent=99 // pred_region
          %s2121 = sand.u32 %s412, 1
          %s2122 = scalar_lea.sflag [#allocation5], %s2121
          %s2123 = sand.u32 %s412, 1
          %s2124 = smul.addr %s2123, 8
          %s2125 = scalar_lea.vmem [#allocation8], %s2124
          %2126 = dma.done %s2122, 128
        $region104: #{tpu_custom_call.1} parent=99 // pred_fallthru
          _
      $region100: #{tpu_custom_call.1} parent=5 // pred_fallthru
        _
    $region6: #{tpu_custom_call.1} parent=1 // loop_footer
      %s31 = sadd.s32 1, %s27
    $region7: #{tpu_custom_call.1} parent=1 // loop_footer_branch
      %26 = sbr.rel target = $region3
    $region8: #{tpu_custom_call.1} parent=1 // loop_exit
      _
    %2127 = vsyncpa [#allocation4], 1
    %s2128 = scalar_lea.sflag [#allocation4], 1
    %2129 = vsyncpa %s2128, 1
    %2130 = vsyncpa [#allocation7], 1
    %2131 = vsyncpa [#allocation5], 1
    %s2132 = scalar_lea.sflag [#allocation5], 1
    %2133 = vsyncpa %s2132, 1

</llo_original>
